<compile_context>
chip_gen: v7x
topology: tpu7x:2x2x1
jax: 0.10.0
libtpu: 0.0.40
codegen_flags: <defaults>
</compile_context>

<pallas_src>
import functools

import jax
import jax.numpy as jnp
from jax.experimental import pallas as pl
from jax.experimental.pallas import tpu as pltpu


# ----------------------------------------------------------------------------
# Pallas kernels
# ----------------------------------------------------------------------------
def _vmem_spec():
    return pl.BlockSpec(memory_space=pltpu.MemorySpace.VMEM)


def _fused_encoder_reg_gen_kernel(
    x_ref, adjb_ref, avgb_ref, noise_ref,        # [NB,F], [NB,NB], [N,NB], [NB,L]
    ew1_ref, eb1_ref, ew2_ref, eb2_ref,          # encoder GNN weights
    rw_ref, rb_ref,                              # RegModel weights
    gw1_ref, gb1_ref, gw2_ref, gb2_ref, gw3_ref, gb3_ref,  # Gen MLP weights
    deg_ref, gen_ref,                            # outputs: [N,1], [NB, P*F]
):
    f32 = jnp.float32
    x = x_ref[...]
    adjb = adjb_ref[...]

    # ---- encoder GNN: relu(adj @ (x @ W1) + b1) -> dropout(id) ->
    #                   relu(adj @ (h @ W2) + b2) ----
    s1 = jnp.dot(x, ew1_ref[...], preferred_element_type=f32)            # [NB,H]
    h = jnp.maximum(jnp.dot(adjb, s1, preferred_element_type=f32) + eb1_ref[...], 0.0)
    s2 = jnp.dot(h, ew2_ref[...], preferred_element_type=f32)            # [NB,L]
    z = jnp.maximum(jnp.dot(adjb, s2, preferred_element_type=f32) + eb2_ref[...], 0.0)

    # ---- RegModel: relu(mean_batch(z @ w + b)) == relu(mean_batch(z) @ w + b)
    zbar = jnp.dot(avgb_ref[...], z, preferred_element_type=f32)         # [N,L]
    deg_ref[...] = jnp.maximum(
        jnp.dot(zbar, rw_ref[...], preferred_element_type=f32) + rb_ref[...], 0.0
    )

    # ---- Gen: Sampling noise (precomputed N(0,1)) + relu/relu/tanh MLP ----
    g = z + noise_ref[...]
    g = jnp.maximum(jnp.dot(g, gw1_ref[...], preferred_element_type=f32) + gb1_ref[...], 0.0)
    g = jnp.maximum(jnp.dot(g, gw2_ref[...], preferred_element_type=f32) + gb2_ref[...], 0.0)
    gen_ref[...] = jnp.tanh(
        jnp.dot(g, gw3_ref[...], preferred_element_type=f32) + gb3_ref[...]
    )


def fused_encoder_reg_gen(x2d, adjB, avgB, noise, params):
    NB = x2d.shape[0]
    N = avgB.shape[0]
    pf = params["gen_w3"].shape[1]
    in_specs = [_vmem_spec() for _ in range(16)]
    return pl.pallas_call(
        _fused_encoder_reg_gen_kernel,
        in_specs=in_specs,
        out_specs=(_vmem_spec(), _vmem_spec()),
        out_shape=(
            jax.ShapeDtypeStruct((N, 1), jnp.float32),
            jax.ShapeDtypeStruct((NB, pf), jnp.float32),
        ),
    )(
        x2d, adjB, avgB, noise,
        params["enc_w1"], params["enc_b1"], params["enc_w2"], params["enc_b2"],
        params["reg_w"], params["reg_b"],
        params["gen_w1"], params["gen_b1"], params["gen_w2"], params["gen_b2"],
        params["gen_w3"], params["gen_b3"],
    )


def _mend_gcn_kernel(x_ref, adjb_ref, w_ref, b_ref, o_ref):
    # GCN class: relu(dropout(relu(adj @ (x @ W) + b))) == relu(adj@(x@W)+b)
    s = jnp.dot(x_ref[...], w_ref[...], preferred_element_type=jnp.float32)
    a = jnp.dot(adjb_ref[...], s, preferred_element_type=jnp.float32)
    o_ref[...] = jnp.maximum(a + b_ref[...], 0.0).astype(o_ref.dtype)


def mend_gcn(x2d, adjB, w, b):
    return pl.pallas_call(
        _mend_gcn_kernel,
        in_specs=[_vmem_spec() for _ in range(4)],
        out_specs=_vmem_spec(),
        out_shape=jax.ShapeDtypeStruct((x2d.shape[0], w.shape[1]), jnp.float32),
    )(x2d, adjB, w, b)


# ----------------------------------------------------------------------------
# LocalSage_Plus forward (jit'd; MendGraph glue is plain JAX between kernels)
# ----------------------------------------------------------------------------
@functools.partial(jax.jit, static_argnames=("num_pred", "feat_shape"))
def local_sage_plus_forward(params, feat, edges, adj, noise, *, num_pred, feat_shape):
    N, B1, B2, F = feat.shape
    assert F == feat_shape
    B = B1 * B2
    NB = N * B
    total = N * (1 + num_pred)

    # Node-major flatten: feat is already [node, b1, b2, F], so this is free.
    x2d = feat.reshape(NB, F).astype(jnp.float32)
    eyeB = jnp.eye(B, dtype=jnp.float32)
    adjB = jnp.kron(adj.astype(jnp.float32), eyeB)                     # [NB, NB]
    avgB = jnp.kron(jnp.eye(N, dtype=jnp.float32),
                    jnp.full((1, B), 1.0 / B, jnp.float32))            # [N, NB]

    # ---- fused encoder GNN + RegModel + Gen (one pallas_call) ----
    degree, gen2d = fused_encoder_reg_gen(x2d, adjB, avgB, noise, params)
    # degree: [N, 1]   gen2d: [NB, num_pred*F] (rows node-major)

    # ---- MendGraph glue: data-dependent dense adjacency + row normalization ----
    deg_i = jnp.clip(degree[:, 0].astype(jnp.int32), 0, num_pred)  # trunc like _cast_Int
    A = jnp.zeros((total, total), jnp.float32)
    A = A.at[edges[:, 0], edges[:, 1]].max(1.0)
    A = A.at[edges[:, 1], edges[:, 0]].max(1.0)
    ii = jnp.arange(N)[:, None]
    jj = jnp.arange(num_pred)[None, :]
    mask = (jj < deg_i[:, None]).astype(jnp.float32)
    new_dst = (N + ii * num_pred + jj).reshape(-1)
    new_src = jnp.broadcast_to(ii, (N, num_pred)).reshape(-1)
    A = A.at[new_src, new_dst].max(mask.reshape(-1))
    A = A.at[new_dst, new_src].max(mask.reshape(-1))
    A = A + jnp.eye(total, dtype=jnp.float32)
    rowsum = jnp.sum(A, axis=1)
    r_inv = jnp.where(rowsum > 0, 1.0 / rowsum, 0.0)
    mend_adj = A * r_inv[:, None]
    mend_adjB = jnp.kron(mend_adj, eyeB)                               # [total*B, total*B]

    # fill_feats, node-major: original nodes then generated nodes (i*P + j)
    feat_nodes = feat.reshape(N, B, F).astype(jnp.float32)
    gen_nodes = (
        gen2d.reshape(N, B, num_pred, F).transpose(0, 2, 1, 3).reshape(N * num_pred, B, F)
    )
    fill2d = jnp.concatenate([feat_nodes, gen_nodes], axis=0).reshape(total * B, F)

    # ---- final GCN on the mended graph (second pallas_call) ----
    out2d = mend_gcn(fill2d, mend_adjB, params["gcn_w"], params["gcn_b"])

    # Outputs in the reference layouts.
    gen_feat = gen2d.reshape(N, B1, B2, num_pred * F).transpose(1, 2, 0, 3)
    gcn_out = out2d.reshape(total, B1, B2, F)      # already == permute(2,0,1,3)
    return degree, gen_feat, gcn_out


# ----------------------------------------------------------------------------
# Deterministic parameter initialization (synthetic weights, no checkpoint)
# ----------------------------------------------------------------------------
def init_params(key, feat_shape, hidden, latent, num_pred):
    keys = jax.random.split(key, 7)

    def lin(k, fi, fo):
        kw, kb = jax.random.split(k)
        w = jax.random.normal(kw, (fi, fo), jnp.float32) / jnp.sqrt(float(fi))
        b = jax.random.normal(kb, (1, fo), jnp.float32) * 0.01
        return w, b

    p = {}
    p["enc_w1"], p["enc_b1"] = lin(keys[0], feat_shape, hidden)
    p["enc_w2"], p["enc_b2"] = lin(keys[1], hidden, latent)
    p["reg_w"], p["reg_b"] = lin(keys[2], latent, 1)
    p["gen_w1"], p["gen_b1"] = lin(keys[3], latent, 256)
    p["gen_w2"], p["gen_b2"] = lin(keys[4], 256, 1024)
    p["gen_w3"], p["gen_b3"] = lin(keys[5], 1024, num_pred * feat_shape)
    p["gcn_w"], p["gcn_b"] = lin(keys[6], feat_shape, feat_shape)
    return p


if __name__ == "__main__":
    N, B1, B2 = 8, 2, 1
    FEAT, HIDDEN, LATENT, NUM_PRED = 16, 32, 16, 2

    key = jax.random.PRNGKey(0)
    k_feat, k_params, k_noise = jax.random.split(key, 3)

    # feat is [node, b1, b2, feat] as expected by LocalSage_Plus.forward
    feat = jax.random.normal(k_feat, (N, B1, B2, FEAT), jnp.float32)

    # deterministic undirected edge list (no self-loops)
    E = 12
    idx = jnp.arange(E)
    src = idx % N
    dst = (src + 1 + idx // N) % N
    edges = jnp.stack([src, dst], axis=1).astype(jnp.int32)

    # row-normalized (A + I) adjacency of the original graph (kernel input adj)
    A0 = jnp.zeros((N, N), jnp.float32)
    A0 = A0.at[src, dst].max(1.0)
    A0 = A0.at[dst, src].max(1.0)
    A0 = A0 + jnp.eye(N, dtype=jnp.float32)
    adj = A0 / jnp.sum(A0, axis=1, keepdims=True)

    params = init_params(k_params, FEAT, HIDDEN, LATENT, NUM_PRED)
    # Sampling noise ~ N(0,1), same role as torch.normal(0, 1, size=z.shape).
    noise = jax.random.normal(k_noise, (N * B1 * B2, LATENT), jnp.float32)

    degree, gen_feat, gcn_out = local_sage_plus_forward(
        params, feat, edges, adj, noise, num_pred=NUM_PRED, feat_shape=FEAT
    )
    jax.block_until_ready((degree, gen_feat, gcn_out))

    assert degree.shape == (N, 1)
    assert gen_feat.shape == (B1, B2, N, NUM_PRED * FEAT)
    assert gcn_out.shape == (N * (1 + NUM_PRED), B1, B2, FEAT)
    print("KERNEL_OK")
</pallas_src>

<mosaic_0001>
module attributes {stable_mosaic.version = 11 : i64} {
  func.func private @main(%arg0: i32) attributes {dimension_semantics = [#tpu.dimension_semantics<core_parallel>], iteration_bounds = array<i64: 2>, tpu.core_type = #tpu.core_type<sc_scalar_subcore>, window_params = []} {
    return
  }
}

module attributes {stable_mosaic.version = 11 : i64} {
  func.func private @main(%arg0: i32) attributes {dimension_semantics = [#tpu.dimension_semantics<core_parallel>], iteration_bounds = array<i64: 2>, tpu.core_type = #tpu.core_type<sc_scalar_subcore>, window_params = []} {
    return
  }
}

module attributes {stable_mosaic.version = 11 : i64} {
  func.func @_fused_encoder_reg_gen_kernel(%arg0: memref<16x16xf32, #tpu.memory_space<vmem>>, %arg1: memref<16x16xf32, #tpu.memory_space<vmem>>, %arg2: memref<8x16xf32, #tpu.memory_space<vmem>>, %arg3: memref<16x16xf32, #tpu.memory_space<vmem>>, %arg4: memref<16x32xf32, #tpu.memory_space<vmem>>, %arg5: memref<1x32xf32, #tpu.memory_space<vmem>>, %arg6: memref<32x16xf32, #tpu.memory_space<vmem>>, %arg7: memref<1x16xf32, #tpu.memory_space<vmem>>, %arg8: memref<16x1xf32, #tpu.memory_space<vmem>>, %arg9: memref<1x1xf32, #tpu.memory_space<vmem>>, %arg10: memref<16x256xf32, #tpu.memory_space<vmem>>, %arg11: memref<1x256xf32, #tpu.memory_space<vmem>>, %arg12: memref<256x1024xf32, #tpu.memory_space<vmem>>, %arg13: memref<1x1024xf32, #tpu.memory_space<vmem>>, %arg14: memref<1024x32xf32, #tpu.memory_space<vmem>>, %arg15: memref<1x32xf32, #tpu.memory_space<vmem>>, %arg16: memref<8x1xf32, #tpu.memory_space<vmem>>, %arg17: memref<16x32xf32, #tpu.memory_space<vmem>>) attributes {dimension_semantics = [], scalar_prefetch = 0 : i64, scratch_operands = 0 : i64, tpu.core_type = #tpu.core_type<tc>} {
    %c0 = arith.constant 0 : index
    %c0_0 = arith.constant 0 : index
    %0 = vector.load %arg0[%c0, %c0_0] : memref<16x16xf32, #tpu.memory_space<vmem>>, vector<16x16xf32>
    %c0_1 = arith.constant 0 : index
    %c0_2 = arith.constant 0 : index
    %1 = vector.load %arg1[%c0_1, %c0_2] : memref<16x16xf32, #tpu.memory_space<vmem>>, vector<16x16xf32>
    %c0_3 = arith.constant 0 : index
    %c0_4 = arith.constant 0 : index
    %2 = vector.load %arg4[%c0_3, %c0_4] : memref<16x32xf32, #tpu.memory_space<vmem>>, vector<16x32xf32>
    %cst = arith.constant dense<0.000000e+00> : vector<16x32xf32>
    %3 = tpu.matmul %0, %2, %cst {dimension_numbers = #tpu.dot_dimension_numbers<[1], [0], [0], [1], [0, 0, 1, 1], [], []>} : vector<16x16xf32>, vector<16x32xf32>, vector<16x32xf32> -> vector<16x32xf32>
    %cst_5 = arith.constant dense<0.000000e+00> : vector<16x32xf32>
    %4 = tpu.matmul %1, %3, %cst_5 {dimension_numbers = #tpu.dot_dimension_numbers<[1], [0], [0], [1], [0, 0, 1, 1], [], []>} : vector<16x16xf32>, vector<16x32xf32>, vector<16x32xf32> -> vector<16x32xf32>
    %c0_6 = arith.constant 0 : index
    %c0_7 = arith.constant 0 : index
    %5 = vector.load %arg5[%c0_6, %c0_7] : memref<1x32xf32, #tpu.memory_space<vmem>>, vector<1x32xf32>
    %6 = vector.broadcast %5 : vector<1x32xf32> to vector<16x32xf32>
    %7 = arith.addf %4, %6 : vector<16x32xf32>
    %cst_8 = arith.constant 0.000000e+00 : f32
    %8 = vector.broadcast %cst_8 : f32 to vector<16x32xf32>
    %9 = arith.maximumf %7, %8 : vector<16x32xf32>
    %c0_9 = arith.constant 0 : index
    %c0_10 = arith.constant 0 : index
    %10 = vector.load %arg6[%c0_9, %c0_10] : memref<32x16xf32, #tpu.memory_space<vmem>>, vector<32x16xf32>
    %cst_11 = arith.constant dense<0.000000e+00> : vector<16x16xf32>
    %11 = tpu.matmul %9, %10, %cst_11 {dimension_numbers = #tpu.dot_dimension_numbers<[1], [0], [0], [1], [0, 0, 1, 1], [], []>} : vector<16x32xf32>, vector<32x16xf32>, vector<16x16xf32> -> vector<16x16xf32>
    %cst_12 = arith.constant dense<0.000000e+00> : vector<16x16xf32>
    %12 = tpu.matmul %1, %11, %cst_12 {dimension_numbers = #tpu.dot_dimension_numbers<[1], [0], [0], [1], [0, 0, 1, 1], [], []>} : vector<16x16xf32>, vector<16x16xf32>, vector<16x16xf32> -> vector<16x16xf32>
    %c0_13 = arith.constant 0 : index
    %c0_14 = arith.constant 0 : index
    %13 = vector.load %arg7[%c0_13, %c0_14] : memref<1x16xf32, #tpu.memory_space<vmem>>, vector<1x16xf32>
    %14 = vector.broadcast %13 : vector<1x16xf32> to vector<16x16xf32>
    %15 = arith.addf %12, %14 : vector<16x16xf32>
    %cst_15 = arith.constant 0.000000e+00 : f32
    %16 = vector.broadcast %cst_15 : f32 to vector<16x16xf32>
    %17 = arith.maximumf %15, %16 : vector<16x16xf32>
    %c0_16 = arith.constant 0 : index
    %c0_17 = arith.constant 0 : index
    %18 = vector.load %arg2[%c0_16, %c0_17] : memref<8x16xf32, #tpu.memory_space<vmem>>, vector<8x16xf32>
    %cst_18 = arith.constant dense<0.000000e+00> : vector<8x16xf32>
    %19 = tpu.matmul %18, %17, %cst_18 {dimension_numbers = #tpu.dot_dimension_numbers<[1], [0], [0], [1], [0, 0, 1, 1], [], []>} : vector<8x16xf32>, vector<16x16xf32>, vector<8x16xf32> -> vector<8x16xf32>
    %c0_19 = arith.constant 0 : index
    %c0_20 = arith.constant 0 : index
    %20 = vector.load %arg8[%c0_19, %c0_20] : memref<16x1xf32, #tpu.memory_space<vmem>>, vector<16x1xf32>
    %cst_21 = arith.constant dense<0.000000e+00> : vector<8x1xf32>
    %21 = tpu.matmul %19, %20, %cst_21 {dimension_numbers = #tpu.dot_dimension_numbers<[1], [0], [0], [1], [0, 0, 1, 1], [], []>} : vector<8x16xf32>, vector<16x1xf32>, vector<8x1xf32> -> vector<8x1xf32>
    %c0_22 = arith.constant 0 : index
    %c0_23 = arith.constant 0 : index
    %22 = vector.load %arg9[%c0_22, %c0_23] : memref<1x1xf32, #tpu.memory_space<vmem>>, vector<1x1xf32>
    %23 = vector.broadcast %22 : vector<1x1xf32> to vector<8x1xf32>
    %24 = arith.addf %21, %23 : vector<8x1xf32>
    %cst_24 = arith.constant 0.000000e+00 : f32
    %25 = vector.broadcast %cst_24 : f32 to vector<8x1xf32>
    %26 = arith.maximumf %24, %25 : vector<8x1xf32>
    %c0_25 = arith.constant 0 : index
    %c0_26 = arith.constant 0 : index
    %27 = vector.load %arg16[%c0_25, %c0_26] : memref<8x1xf32, #tpu.memory_space<vmem>>, vector<8x1xf32>
    tpu.vector_store %arg16[%c0_25, %c0_26], %26 {strides = array<i32>} : memref<8x1xf32, #tpu.memory_space<vmem>>, vector<8x1xf32>,
    %c0_27 = arith.constant 0 : index
    %c0_28 = arith.constant 0 : index
    %28 = vector.load %arg3[%c0_27, %c0_28] : memref<16x16xf32, #tpu.memory_space<vmem>>, vector<16x16xf32>
    %29 = arith.addf %17, %28 : vector<16x16xf32>
    %c0_29 = arith.constant 0 : index
    %c0_30 = arith.constant 0 : index
    %30 = vector.load %arg10[%c0_29, %c0_30] : memref<16x256xf32, #tpu.memory_space<vmem>>, vector<16x256xf32>
    %cst_31 = arith.constant dense<0.000000e+00> : vector<16x256xf32>
    %31 = tpu.matmul %29, %30, %cst_31 {dimension_numbers = #tpu.dot_dimension_numbers<[1], [0], [0], [1], [0, 0, 1, 1], [], []>} : vector<16x16xf32>, vector<16x256xf32>, vector<16x256xf32> -> vector<16x256xf32>
    %c0_32 = arith.constant 0 : index
    %c0_33 = arith.constant 0 : index
    %32 = vector.load %arg11[%c0_32, %c0_33] : memref<1x256xf32, #tpu.memory_space<vmem>>, vector<1x256xf32>
    %33 = vector.broadcast %32 : vector<1x256xf32> to vector<16x256xf32>
    %34 = arith.addf %31, %33 : vector<16x256xf32>
    %cst_34 = arith.constant 0.000000e+00 : f32
    %35 = vector.broadcast %cst_34 : f32 to vector<16x256xf32>
    %36 = arith.maximumf %34, %35 : vector<16x256xf32>
    %c0_35 = arith.constant 0 : index
    %c0_36 = arith.constant 0 : index
    %37 = vector.load %arg12[%c0_35, %c0_36] : memref<256x1024xf32, #tpu.memory_space<vmem>>, vector<256x1024xf32>
    %cst_37 = arith.constant dense<0.000000e+00> : vector<16x1024xf32>
    %38 = tpu.matmul %36, %37, %cst_37 {dimension_numbers = #tpu.dot_dimension_numbers<[1], [0], [0], [1], [0, 0, 1, 1], [], []>} : vector<16x256xf32>, vector<256x1024xf32>, vector<16x1024xf32> -> vector<16x1024xf32>
    %c0_38 = arith.constant 0 : index
    %c0_39 = arith.constant 0 : index
    %39 = vector.load %arg13[%c0_38, %c0_39] : memref<1x1024xf32, #tpu.memory_space<vmem>>, vector<1x1024xf32>
    %40 = vector.broadcast %39 : vector<1x1024xf32> to vector<16x1024xf32>
    %41 = arith.addf %38, %40 : vector<16x1024xf32>
    %cst_40 = arith.constant 0.000000e+00 : f32
    %42 = vector.broadcast %cst_40 : f32 to vector<16x1024xf32>
    %43 = arith.maximumf %41, %42 : vector<16x1024xf32>
    %c0_41 = arith.constant 0 : index
    %c0_42 = arith.constant 0 : index
    %44 = vector.load %arg14[%c0_41, %c0_42] : memref<1024x32xf32, #tpu.memory_space<vmem>>, vector<1024x32xf32>
    %cst_43 = arith.constant dense<0.000000e+00> : vector<16x32xf32>
    %45 = tpu.matmul %43, %44, %cst_43 {dimension_numbers = #tpu.dot_dimension_numbers<[1], [0], [0], [1], [0, 0, 1, 1], [], []>} : vector<16x1024xf32>, vector<1024x32xf32>, vector<16x32xf32> -> vector<16x32xf32>
    %c0_44 = arith.constant 0 : index
    %c0_45 = arith.constant 0 : index
    %46 = vector.load %arg15[%c0_44, %c0_45] : memref<1x32xf32, #tpu.memory_space<vmem>>, vector<1x32xf32>
    %47 = vector.broadcast %46 : vector<1x32xf32> to vector<16x32xf32>
    %48 = arith.addf %45, %47 : vector<16x32xf32>
    %49 = math.tanh %48 : vector<16x32xf32>
    %c0_46 = arith.constant 0 : index
    %c0_47 = arith.constant 0 : index
    %50 = vector.load %arg17[%c0_46, %c0_47] : memref<16x32xf32, #tpu.memory_space<vmem>>, vector<16x32xf32>
    tpu.vector_store %arg17[%c0_46, %c0_47], %49 {strides = array<i32>} : memref<16x32xf32, #tpu.memory_space<vmem>>, vector<16x32xf32>,
    return
  }
}

module attributes {stable_mosaic.version = 11 : i64} {
  func.func @_mend_gcn_kernel(%arg0: memref<48x16xf32, #tpu.memory_space<vmem>>, %arg1: memref<48x48xf32, #tpu.memory_space<vmem>>, %arg2: memref<16x16xf32, #tpu.memory_space<vmem>>, %arg3: memref<1x16xf32, #tpu.memory_space<vmem>>, %arg4: memref<48x16xf32, #tpu.memory_space<vmem>>) attributes {dimension_semantics = [], scalar_prefetch = 0 : i64, scratch_operands = 0 : i64, tpu.core_type = #tpu.core_type<tc>} {
    %c0 = arith.constant 0 : index
    %c0_0 = arith.constant 0 : index
    %0 = vector.load %arg0[%c0, %c0_0] : memref<48x16xf32, #tpu.memory_space<vmem>>, vector<48x16xf32>
    %c0_1 = arith.constant 0 : index
    %c0_2 = arith.constant 0 : index
    %1 = vector.load %arg2[%c0_1, %c0_2] : memref<16x16xf32, #tpu.memory_space<vmem>>, vector<16x16xf32>
    %cst = arith.constant dense<0.000000e+00> : vector<48x16xf32>
    %2 = tpu.matmul %0, %1, %cst {dimension_numbers = #tpu.dot_dimension_numbers<[1], [0], [0], [1], [0, 0, 1, 1], [], []>} : vector<48x16xf32>, vector<16x16xf32>, vector<48x16xf32> -> vector<48x16xf32>
    %c0_3 = arith.constant 0 : index
    %c0_4 = arith.constant 0 : index
    %3 = vector.load %arg1[%c0_3, %c0_4] : memref<48x48xf32, #tpu.memory_space<vmem>>, vector<48x48xf32>
    %cst_5 = arith.constant dense<0.000000e+00> : vector<48x16xf32>
    %4 = tpu.matmul %3, %2, %cst_5 {dimension_numbers = #tpu.dot_dimension_numbers<[1], [0], [0], [1], [0, 0, 1, 1], [], []>} : vector<48x48xf32>, vector<48x16xf32>, vector<48x16xf32> -> vector<48x16xf32>
    %c0_6 = arith.constant 0 : index
    %c0_7 = arith.constant 0 : index
    %5 = vector.load %arg3[%c0_6, %c0_7] : memref<1x16xf32, #tpu.memory_space<vmem>>, vector<1x16xf32>
    %6 = vector.broadcast %5 : vector<1x16xf32> to vector<48x16xf32>
    %7 = arith.addf %4, %6 : vector<48x16xf32>
    %cst_8 = arith.constant 0.000000e+00 : f32
    %8 = vector.broadcast %cst_8 : f32 to vector<48x16xf32>
    %9 = arith.maximumf %7, %8 : vector<48x16xf32>
    %c0_9 = arith.constant 0 : index
    %c0_10 = arith.constant 0 : index
    %10 = vector.load %arg4[%c0_9, %c0_10] : memref<48x16xf32, #tpu.memory_space<vmem>>, vector<48x16xf32>
    tpu.vector_store %arg4[%c0_9, %c0_10], %9 {strides = array<i32>} : memref<48x16xf32, #tpu.memory_space<vmem>>, vector<48x16xf32>,
    return
  }
}

</mosaic_0001>

<llo_original>
// kernel: local_sage_plus_forward.3
$region0: #{local_sage_plus_forward.3}
  #allocation0 [shape = 'u32[]', space=smem, size = 0x4, offset = 0x4, fixed_abs, tag = 'smem constant byte address 0x4 - core index']
  #allocation1 [shape = 'u32[144,128]{1,0:T(1,128)}', space=vmem, size = 0x12000, scoped, tag = 'internal scratch']
  %s0 = inlined_call_operand.vmem [shape: f32[48,16], index: 0, kind: input, shape index: {}]
  %s1 = inlined_call_operand.vmem [shape: f32[48,48], index: 1, kind: input, shape index: {}]
  %s2 = inlined_call_operand.vmem [shape: f32[16,16], index: 2, kind: input, shape index: {}]
  %s3 = inlined_call_operand.vmem [shape: f32[1,16], index: 3, kind: input, shape index: {}]
  %s4 = inlined_call_operand.vmem [shape: f32[48,16], index: 4, kind: output, shape index: {}]
  %s5 = sld [smem:[#allocation0]]
  $region26: #{local_sage_plus_forward.3} parent=0
    _
  %s7 = ssub.s32 1, %s5
  %s8 = scalar_select 0, %s7, %s5
  // Predicated region
  $region2: #{local_sage_plus_forward.3} parent=0 // pred_check
    _
  $region3: #{local_sage_plus_forward.3} parent=0 // pred_check_branch
    %10 = sbr.rel (0) target = $region5
  $region4: #{local_sage_plus_forward.3} parent=0 // pred_region
    _
  $region5: #{local_sage_plus_forward.3} parent=0 // pred_fallthru
    _
  // Predicated region
  $region6: #{local_sage_plus_forward.3} parent=0 // pred_check
    _
  $region7: #{local_sage_plus_forward.3} parent=0 // pred_check_branch
    %12 = sbr.rel (0) target = $region9
  $region8: #{local_sage_plus_forward.3} parent=0 // pred_region
    _
  $region9: #{local_sage_plus_forward.3} parent=0 // pred_fallthru
    _
  // Predicated region
  $region10: #{local_sage_plus_forward.3} parent=0 // pred_check
    _
  $region11: #{local_sage_plus_forward.3} parent=0 // pred_check_branch
    %14 = sbr.rel (0) target = $region13
  $region12: #{local_sage_plus_forward.3} parent=0 // pred_region
    _
  $region13: #{local_sage_plus_forward.3} parent=0 // pred_fallthru
    _
  // Predicated region
  $region14: #{local_sage_plus_forward.3} parent=0 // pred_check
    _
  $region15: #{local_sage_plus_forward.3} parent=0 // pred_check_branch
    %16 = sbr.rel (0) target = $region17
  $region16: #{local_sage_plus_forward.3} parent=0 // pred_region
    _
  $region17: #{local_sage_plus_forward.3} parent=0 // pred_fallthru
    _
  %v17 = vld [vmem:[%s0] sm:$0xff]
  %v18 = vld [vmem:[%s0 + $0x8] sm:$0xff]
  %v19 = vld [vmem:[%s0 + $0x10] sm:$0xff]
  %v20 = vld [vmem:[%s0 + $0x18] sm:$0xff]
  %v21 = vld [vmem:[%s0 + $0x20] sm:$0xff]
  %v22 = vld [vmem:[%s0 + $0x28] sm:$0xff]
  %v23 = vld [vmem:[%s2] sm:$0xff]
  %v24 = vld [vmem:[%s2 + $0x8] sm:$0xff]
  %vm25 = vcmask 130048
  %v27 = vsel %vm25, %v17, 0
  %v30 = vsel %vm25, %v18, 0
  %v33 = vsel %vm25, %v19, 0
  %v36 = vsel %vm25, %v20, 0
  %v39 = vsel %vm25, %v21, 0
  %v42 = vsel %vm25, %v22, 0
  %44 = vmatprep.subr.mxu0 0.0
  %45 = vmatpush1.msra.mxu0 %v23
  %46 = vmatprep.subr.mxu0 0.0
  %47 = vmatpush1.msra.mxu0 %v24
  %48 = vmatprep.subr.mxu0 0.0
  %49 = vmatpush1.msra.mxu0 0.0
  %50 = vmatprep.subr.mxu0 0.0
  %51 = vmatpush1.msra.mxu0 0.0
  %52 = vmatprep.subr.mxu0 0.0
  %53 = vmatpush1.msra.mxu0 0.0
  %54 = vmatprep.subr.mxu0 0.0
  %55 = vmatpush1.msra.mxu0 0.0
  %56 = vmatprep.subr.mxu0 0.0
  %57 = vmatpush1.msra.mxu0 0.0
  %58 = vmatprep.subr.mxu0 0.0
  %59 = vmatpush1.msra.mxu0 0.0
  %60 = vmatprep.subr.mxu0 0.0
  %61 = vmatpush1.msra.mxu0 0.0
  %62 = vmatprep.subr.mxu0 0.0
  %63 = vmatpush1.msra.mxu0 0.0
  %64 = vmatprep.subr.mxu0 0.0
  %65 = vmatpush1.msra.mxu0 0.0
  %66 = vmatprep.subr.mxu0 0.0
  %67 = vmatpush1.msra.mxu0 0.0
  %68 = vmatprep.subr.mxu0 0.0
  %69 = vmatpush1.msra.mxu0 0.0
  %70 = vmatprep.subr.mxu0 0.0
  %71 = vmatpush1.msra.mxu0 0.0
  %72 = vmatprep.subr.mxu0 0.0
  %73 = vmatpush1.msra.mxu0 0.0
  %74 = vmatprep.subr.mxu0 0.0
  %75 = vmatpush1.msra.mxu0 0.0
  %76 = vmatprep.subr.mxu0 0.0
  %77 = vmatpush1.msra.mxu0 0.0
  %78 = vmatprep.subr.mxu0 0.0
  %79 = vmatpush1.msra.mxu0 0.0
  %80 = vmatprep.subr.mxu0 0.0
  %81 = vmatpush1.msra.mxu0 0.0
  %82 = vmatprep.subr.mxu0 0.0
  %83 = vmatpush1.msra.mxu0 0.0
  %84 = vmatprep.subr.mxu0 0.0
  %85 = vmatpush1.msra.mxu0 0.0
  %86 = vmatprep.subr.mxu0 0.0
  %87 = vmatpush1.msra.mxu0 0.0
  %88 = vmatprep.subr.mxu0 0.0
  %89 = vmatpush1.msra.mxu0 0.0
  %90 = vmatprep.subr.mxu0 0.0
  %91 = vmatpush1.msra.mxu0 0.0
  %92 = vmatprep.subr.mxu0 0.0
  %93 = vmatpush1.msra.mxu0 0.0
  %94 = vmatprep.subr.mxu0 0.0
  %95 = vmatpush1.msra.mxu0 0.0
  %96 = vmatprep.subr.mxu0 0.0
  %97 = vmatpush1.msra.mxu0 0.0
  %98 = vmatprep.subr.mxu0 0.0
  %99 = vmatpush1.msra.mxu0 0.0
  %100 = vmatprep.subr.mxu0 0.0
  %101 = vmatpush1.msra.mxu0 0.0
  %102 = vmatprep.subr.mxu0 0.0
  %103 = vmatpush1.msra.mxu0 0.0
  %104 = vmatprep.subr.mxu0 0.0
  %105 = vmatpush1.msra.mxu0 0.0
  %106 = vmatprep.subr.mxu0 0.0
  %107 = vmatpush1.msra.mxu0 0.0
  %108 = vmatprep.mubr.f32.mxu0 0.0
  %109 = vmatmul.mubr.f32.gmra.mrb[0].mxu0 %v27
  %v110 = vpop.f32.mrb[0].mxu0
  %v111 = vadd.f32 0.0, %v110
  %v112 = vpop.f32.mrb[0].mxu0
  %113 = vmatprep.mubr.f32.mxu0 0.0
  %114 = vmatmul.mubr.f32.gmra.mrb[0].mxu0 %v30
  %v115 = vpop.f32.mrb[0].mxu0
  %v116 = vadd.f32 0.0, %v115
  %v117 = vpop.f32.mrb[0].mxu0
  %118 = vmatprep.mubr.f32.mxu0 0.0
  %119 = vmatmul.mubr.f32.gmra.mrb[0].mxu0 %v33
  %v120 = vpop.f32.mrb[0].mxu0
  %v121 = vadd.f32 0.0, %v120
  %v122 = vpop.f32.mrb[0].mxu0
  %123 = vmatprep.mubr.f32.mxu0 0.0
  %124 = vmatmul.mubr.f32.gmra.mrb[0].mxu0 %v36
  %v125 = vpop.f32.mrb[0].mxu0
  %v126 = vadd.f32 0.0, %v125
  %v127 = vpop.f32.mrb[0].mxu0
  %128 = vmatprep.mubr.f32.mxu0 0.0
  %129 = vmatmul.mubr.f32.gmra.mrb[0].mxu0 %v39
  %v130 = vpop.f32.mrb[0].mxu0
  %v131 = vadd.f32 0.0, %v130
  %v132 = vpop.f32.mrb[0].mxu0
  %133 = vmatprep.mubr.f32.mxu0 0.0
  %134 = vmatmul.mubr.f32.gmra.mrb[0].mxu0 %v42
  %v135 = vpop.f32.mrb[0].mxu0
  %v136 = vadd.f32 0.0, %v135
  %v137 = vpop.f32.mrb[0].mxu0
  %138 = vdwg.mxu0
  %v139 = vld [vmem:[%s1] sm:$0xff]
  %v140 = vld [vmem:[%s1 + $0x8] sm:$0xff]
  %v141 = vld [vmem:[%s1 + $0x10] sm:$0xff]
  %v142 = vld [vmem:[%s1 + $0x18] sm:$0xff]
  %v143 = vld [vmem:[%s1 + $0x20] sm:$0xff]
  %v144 = vld [vmem:[%s1 + $0x28] sm:$0xff]
  %v145 = vld [vmem:[%s3] sm:$0x1]
  %v147 = vlaneseq
  %v148 = vshrl.u32 %v147, 7
  %v149 = vsub.s32 0, %v148
  %v150 = vrot.slane %v145, %v149
  %vm152 = vcmask 392192
  %v154 = vsel %vm152, %v139, 0
  %v157 = vsel %vm152, %v140, 0
  %v160 = vsel %vm152, %v141, 0
  %v163 = vsel %vm152, %v142, 0
  %v166 = vsel %vm152, %v143, 0
  %v169 = vsel %vm152, %v144, 0
  %171 = vmatprep.subr.mxu0 0.0
  %172 = vmatpush1.msra.mxu0 %v111
  %173 = vmatprep.subr.mxu0 0.0
  %174 = vmatpush1.msra.mxu0 %v116
  %175 = vmatprep.subr.mxu0 0.0
  %176 = vmatpush1.msra.mxu0 %v121
  %177 = vmatprep.subr.mxu0 0.0
  %178 = vmatpush1.msra.mxu0 %v126
  %179 = vmatprep.subr.mxu0 0.0
  %180 = vmatpush1.msra.mxu0 %v131
  %181 = vmatprep.subr.mxu0 0.0
  %182 = vmatpush1.msra.mxu0 %v136
  %183 = vmatprep.subr.mxu0 0.0
  %184 = vmatpush1.msra.mxu0 0.0
  %185 = vmatprep.subr.mxu0 0.0
  %186 = vmatpush1.msra.mxu0 0.0
  %187 = vmatprep.subr.mxu0 0.0
  %188 = vmatpush1.msra.mxu0 0.0
  %189 = vmatprep.subr.mxu0 0.0
  %190 = vmatpush1.msra.mxu0 0.0
  %191 = vmatprep.subr.mxu0 0.0
  %192 = vmatpush1.msra.mxu0 0.0
  %193 = vmatprep.subr.mxu0 0.0
  %194 = vmatpush1.msra.mxu0 0.0
  %195 = vmatprep.subr.mxu0 0.0
  %196 = vmatpush1.msra.mxu0 0.0
  %197 = vmatprep.subr.mxu0 0.0
  %198 = vmatpush1.msra.mxu0 0.0
  %199 = vmatprep.subr.mxu0 0.0
  %200 = vmatpush1.msra.mxu0 0.0
  %201 = vmatprep.subr.mxu0 0.0
  %202 = vmatpush1.msra.mxu0 0.0
  %203 = vmatprep.subr.mxu0 0.0
  %204 = vmatpush1.msra.mxu0 0.0
  %205 = vmatprep.subr.mxu0 0.0
  %206 = vmatpush1.msra.mxu0 0.0
  %207 = vmatprep.subr.mxu0 0.0
  %208 = vmatpush1.msra.mxu0 0.0
  %209 = vmatprep.subr.mxu0 0.0
  %210 = vmatpush1.msra.mxu0 0.0
  %211 = vmatprep.subr.mxu0 0.0
  %212 = vmatpush1.msra.mxu0 0.0
  %213 = vmatprep.subr.mxu0 0.0
  %214 = vmatpush1.msra.mxu0 0.0
  %215 = vmatprep.subr.mxu0 0.0
  %216 = vmatpush1.msra.mxu0 0.0
  %217 = vmatprep.subr.mxu0 0.0
  %218 = vmatpush1.msra.mxu0 0.0
  %219 = vmatprep.subr.mxu0 0.0
  %220 = vmatpush1.msra.mxu0 0.0
  %221 = vmatprep.subr.mxu0 0.0
  %222 = vmatpush1.msra.mxu0 0.0
  %223 = vmatprep.subr.mxu0 0.0
  %224 = vmatpush1.msra.mxu0 0.0
  %225 = vmatprep.subr.mxu0 0.0
  %226 = vmatpush1.msra.mxu0 0.0
  %227 = vmatprep.subr.mxu0 0.0
  %228 = vmatpush1.msra.mxu0 0.0
  %229 = vmatprep.subr.mxu0 0.0
  %230 = vmatpush1.msra.mxu0 0.0
  %231 = vmatprep.subr.mxu0 0.0
  %232 = vmatpush1.msra.mxu0 0.0
  %233 = vmatprep.subr.mxu0 0.0
  %234 = vmatpush1.msra.mxu0 0.0
  %235 = vmatprep.mubr.f32.mxu0 0.0
  %236 = vmatmul.mubr.f32.gmra.mrb[0].mxu0 %v154
  %v237 = vpop.f32.mrb[0].mxu0
  %v238 = vadd.f32 %v150, %v237
  %v239 = vpop.f32.mrb[0].mxu0
  %240 = vmatprep.mubr.f32.mxu0 0.0
  %241 = vmatmul.mubr.f32.gmra.mrb[0].mxu0 %v157
  %v242 = vpop.f32.mrb[0].mxu0
  %v243 = vadd.f32 %v150, %v242
  %v244 = vpop.f32.mrb[0].mxu0
  %245 = vmatprep.mubr.f32.mxu0 0.0
  %246 = vmatmul.mubr.f32.gmra.mrb[0].mxu0 %v160
  %v247 = vpop.f32.mrb[0].mxu0
  %v248 = vadd.f32 %v150, %v247
  %v249 = vpop.f32.mrb[0].mxu0
  %250 = vmatprep.mubr.f32.mxu0 0.0
  %251 = vmatmul.mubr.f32.gmra.mrb[0].mxu0 %v163
  %v252 = vpop.f32.mrb[0].mxu0
  %v253 = vadd.f32 %v150, %v252
  %v254 = vpop.f32.mrb[0].mxu0
  %255 = vmatprep.mubr.f32.mxu0 0.0
  %256 = vmatmul.mubr.f32.gmra.mrb[0].mxu0 %v166
  %v257 = vpop.f32.mrb[0].mxu0
  %v258 = vadd.f32 %v150, %v257
  %v259 = vpop.f32.mrb[0].mxu0
  %260 = vmatprep.mubr.f32.mxu0 0.0
  %261 = vmatmul.mubr.f32.gmra.mrb[0].mxu0 %v169
  %v262 = vpop.f32.mrb[0].mxu0
  %v263 = vadd.f32 %v150, %v262
  %v264 = vpop.f32.mrb[0].mxu0
  %265 = vdwg.mxu0
  %v266 = vmax.f32 %v238, 0.0
  %v267 = vmax.f32 %v243, 0.0
  %v268 = vmax.f32 %v248, 0.0
  %v269 = vmax.f32 %v253, 0.0
  %v270 = vmax.f32 %v258, 0.0
  %v271 = vmax.f32 %v263, 0.0
  %272 = vst.msk [vmem:[%s4] sm:$0xff] %vm25, %v266
  %273 = vst.msk [vmem:[%s4 + $0x8] sm:$0xff] %vm25, %v267
  %274 = vst.msk [vmem:[%s4 + $0x10] sm:$0xff] %vm25, %v268
  %275 = vst.msk [vmem:[%s4 + $0x18] sm:$0xff] %vm25, %v269
  %276 = vst.msk [vmem:[%s4 + $0x20] sm:$0xff] %vm25, %v270
  %277 = vst.msk [vmem:[%s4 + $0x28] sm:$0xff] %vm25, %v271
  // Predicated region
  $region18: #{local_sage_plus_forward.3} parent=0 // pred_check
    _
  $region19: #{local_sage_plus_forward.3} parent=0 // pred_check_branch
    %279 = sbr.rel (0) target = $region21
  $region20: #{local_sage_plus_forward.3} parent=0 // pred_region
    _
  $region21: #{local_sage_plus_forward.3} parent=0 // pred_fallthru
    _
  // Predicated region
  $region22: #{local_sage_plus_forward.3} parent=0 // pred_check
    _
  $region23: #{local_sage_plus_forward.3} parent=0 // pred_check_branch
    %281 = sbr.rel (0) target = $region25
  $region24: #{local_sage_plus_forward.3} parent=0 // pred_region
    _
  $region25: #{local_sage_plus_forward.3} parent=0 // pred_fallthru
    _

// kernel: local_sage_plus_forward.2
$region0: #{local_sage_plus_forward.2}
  #allocation0 [shape = 'u32[]', space=smem, size = 0x4, offset = 0x4, fixed_abs, tag = 'smem constant byte address 0x4 - core index']
  #allocation1 [shape = 'u32[144,128]{1,0:T(1,128)}', space=vmem, size = 0x12000, scoped, tag = 'internal scratch']
  #allocation2 [shape = 'f32[1,1]{1,0:T(1,128)S(1)}', space=vmem, size = 0x200, scoped, tag = 'scoped memory for local_sage_plus_forward.2']
  %s0 = inlined_call_operand.vmem [shape: f32[16,16], index: 0, kind: input, shape index: {}]
  %s1 = inlined_call_operand.vmem [shape: f32[16,16], index: 1, kind: input, shape index: {}]
  %s2 = inlined_call_operand.vmem [shape: f32[8,16], index: 2, kind: input, shape index: {}]
  %s3 = inlined_call_operand.vmem [shape: f32[16,16], index: 3, kind: input, shape index: {}]
  %s4 = inlined_call_operand.vmem [shape: f32[16,32], index: 4, kind: input, shape index: {}]
  %s5 = inlined_call_operand.vmem [shape: f32[1,32], index: 5, kind: input, shape index: {}]
  %s6 = inlined_call_operand.vmem [shape: f32[32,16], index: 6, kind: input, shape index: {}]
  %s7 = inlined_call_operand.vmem [shape: f32[1,16], index: 7, kind: input, shape index: {}]
  %s8 = inlined_call_operand.vmem [shape: f32[16,1], index: 8, kind: input, shape index: {}]
  %s9 = inlined_call_operand.<no memory space> [shape: f32[1,1], index: 9, kind: input, shape index: {}]
  %s10 = inlined_call_operand.vmem [shape: f32[16,256], index: 10, kind: input, shape index: {}]
  %s11 = inlined_call_operand.vmem [shape: f32[1,256], index: 11, kind: input, shape index: {}]
  %s12 = inlined_call_operand.hbm [shape: f32[256,1024], index: 12, kind: input, shape index: {}]
  %s13 = inlined_call_operand.vmem [shape: f32[1,1024], index: 13, kind: input, shape index: {}]
  %s14 = inlined_call_operand.vmem [shape: f32[1024,32], index: 14, kind: input, shape index: {}]
  %s15 = inlined_call_operand.vmem [shape: f32[1,32], index: 15, kind: input, shape index: {}]
  %s16 = inlined_call_operand.vmem [shape: f32[8,1], index: 16, kind: output, shape index: {0}]
  %s17 = inlined_call_operand.vmem [shape: f32[16,32], index: 17, kind: output, shape index: {1}]
  %18 = xla_tuple %s16, %s17
  %s19 = sld [smem:[#allocation0]]
  $region86: #{local_sage_plus_forward.2} parent=0
    _
  %s21 = ssub.s32 1, %s19
  %s22 = scalar_select 0, %s21, %s19
  %v23 = vstv %s9
  %24 = vst [vmem:[#allocation2] sm:$0x1] %v23
  $region1: #{local_sage_plus_forward.2} parent=0
    #allocation3 [shape = 'u8[1048576]{0}', space=vmem, size = 0x100000, scoped, tag = 'input window, operand 12, single buffered']
    #allocation4 [shape = 's32[1]{0}', space=sflag, size = 0x4, scoped, tag = 'scoped memory for local_sage_plus_forward.2']
    %25 = vsyncpa [#allocation4], 0
    // Predicated region
    $region2: #{local_sage_plus_forward.2} parent=1 // pred_check
      _
    $region3: #{local_sage_plus_forward.2} parent=1 // pred_check_branch
      %27 = sbr.rel (0) target = $region5
    $region4: #{local_sage_plus_forward.2} parent=1 // pred_region
      _
    $region5: #{local_sage_plus_forward.2} parent=1 // pred_fallthru
      _
    // Predicated region
    $region6: #{local_sage_plus_forward.2} parent=1 // pred_check
      _
    $region7: #{local_sage_plus_forward.2} parent=1 // pred_check_branch
      %29 = sbr.rel (0) target = $region9
    $region8: #{local_sage_plus_forward.2} parent=1 // pred_region
      _
    $region9: #{local_sage_plus_forward.2} parent=1 // pred_fallthru
      _
    // Predicated region
    $region10: #{local_sage_plus_forward.2} parent=1 // pred_check
      _
    $region11: #{local_sage_plus_forward.2} parent=1 // pred_check_branch
      %31 = sbr.rel (0) target = $region13
    $region12: #{local_sage_plus_forward.2} parent=1 // pred_region
      _
    $region13: #{local_sage_plus_forward.2} parent=1 // pred_fallthru
      _
    // Predicated region
    $region14: #{local_sage_plus_forward.2} parent=1 // pred_check
      _
    $region15: #{local_sage_plus_forward.2} parent=1 // pred_check_branch
      %33 = sbr.rel (0) target = $region17
    $region16: #{local_sage_plus_forward.2} parent=1 // pred_region
      _
    $region17: #{local_sage_plus_forward.2} parent=1 // pred_fallthru
      _
    // Predicated region
    $region18: #{local_sage_plus_forward.2} parent=1 // pred_check
      _
    $region19: #{local_sage_plus_forward.2} parent=1 // pred_check_branch
      %35 = sbr.rel (0) target = $region21
    $region20: #{local_sage_plus_forward.2} parent=1 // pred_region
      _
    $region21: #{local_sage_plus_forward.2} parent=1 // pred_fallthru
      _
    // Predicated region
    $region22: #{local_sage_plus_forward.2} parent=1 // pred_check
      _
    $region23: #{local_sage_plus_forward.2} parent=1 // pred_check_branch
      %37 = sbr.rel (0) target = $region25
    $region24: #{local_sage_plus_forward.2} parent=1 // pred_region
      _
    $region25: #{local_sage_plus_forward.2} parent=1 // pred_fallthru
      _
    // Predicated region
    $region26: #{local_sage_plus_forward.2} parent=1 // pred_check
      _
    $region27: #{local_sage_plus_forward.2} parent=1 // pred_check_branch
      %39 = sbr.rel (0) target = $region29
    $region28: #{local_sage_plus_forward.2} parent=1 // pred_region
      _
    $region29: #{local_sage_plus_forward.2} parent=1 // pred_fallthru
      _
    // Predicated region
    $region30: #{local_sage_plus_forward.2} parent=1 // pred_check
      _
    $region31: #{local_sage_plus_forward.2} parent=1 // pred_check_branch
      %41 = sbr.rel (0) target = $region33
    $region32: #{local_sage_plus_forward.2} parent=1 // pred_region
      _
    $region33: #{local_sage_plus_forward.2} parent=1 // pred_fallthru
      _
    // Predicated region
    $region34: #{local_sage_plus_forward.2} parent=1 // pred_check
      _
    $region35: #{local_sage_plus_forward.2} parent=1 // pred_check_branch
      %43 = sbr.rel (0) target = $region37
    $region36: #{local_sage_plus_forward.2} parent=1 // pred_region
      _
    $region37: #{local_sage_plus_forward.2} parent=1 // pred_fallthru
      _
    // Predicated region
    $region38: #{local_sage_plus_forward.2} parent=1 // pred_check
      _
    $region39: #{local_sage_plus_forward.2} parent=1 // pred_check_branch
      %45 = sbr.rel (0) target = $region41
    $region40: #{local_sage_plus_forward.2} parent=1 // pred_region
      _
    $region41: #{local_sage_plus_forward.2} parent=1 // pred_fallthru
      _
    // Predicated region
    $region42: #{local_sage_plus_forward.2} parent=1 // pred_check
      _
    $region43: #{local_sage_plus_forward.2} parent=1 // pred_check_branch
      %47 = sbr.rel (0) target = $region45
    $region44: #{local_sage_plus_forward.2} parent=1 // pred_region
      _
    $region45: #{local_sage_plus_forward.2} parent=1 // pred_fallthru
      _
    // Predicated region
    $region46: #{local_sage_plus_forward.2} parent=1 // pred_check
      _
    $region47: #{local_sage_plus_forward.2} parent=1 // pred_check_branch
      %49 = sbr.rel (0) target = $region49
    $region48: #{local_sage_plus_forward.2} parent=1 // pred_region
      _
    $region49: #{local_sage_plus_forward.2} parent=1 // pred_fallthru
      _
    // Predicated region
    $region50: #{local_sage_plus_forward.2} parent=1 // pred_check
      _
    $region51: #{local_sage_plus_forward.2} parent=1 // pred_check_branch
      %51 = sbr.rel (0) target = $region53
    $region52: #{local_sage_plus_forward.2} parent=1 // pred_region
      %s53 = ssub.s32 32768, 32768
      %54 = vsyncadd [#allocation4], %s53
      %s55 = sshll.u32 [#allocation3], 4
      %s56 = int_to_ptr.vmem [resolvable:$true] %s55
      %61 = dma.hbm_to_vmem [thread:$0]  %s12, 32768, %s56, [#allocation4], 1024, 1024, 64
    $region53: #{local_sage_plus_forward.2} parent=1 // pred_fallthru
      _
    // Predicated region
    $region54: #{local_sage_plus_forward.2} parent=1 // pred_check
      _
    $region55: #{local_sage_plus_forward.2} parent=1 // pred_check_branch
      %63 = sbr.rel (0) target = $region57
    $region56: #{local_sage_plus_forward.2} parent=1 // pred_region
      _
    $region57: #{local_sage_plus_forward.2} parent=1 // pred_fallthru
      _
    // Predicated region
    $region58: #{local_sage_plus_forward.2} parent=1 // pred_check
      _
    $region59: #{local_sage_plus_forward.2} parent=1 // pred_check_branch
      %65 = sbr.rel (0) target = $region61
    $region60: #{local_sage_plus_forward.2} parent=1 // pred_region
      _
    $region61: #{local_sage_plus_forward.2} parent=1 // pred_fallthru
      _
    // Predicated region
    $region62: #{local_sage_plus_forward.2} parent=1 // pred_check
      _
    $region63: #{local_sage_plus_forward.2} parent=1 // pred_check_branch
      %67 = sbr.rel (0) target = $region65
    $region64: #{local_sage_plus_forward.2} parent=1 // pred_region
      _
    $region65: #{local_sage_plus_forward.2} parent=1 // pred_fallthru
      _
    // Predicated region
    $region66: #{local_sage_plus_forward.2} parent=1 // pred_check
      _
    $region67: #{local_sage_plus_forward.2} parent=1 // pred_check_branch
      %69 = sbr.rel (0) target = $region69
    $region68: #{local_sage_plus_forward.2} parent=1 // pred_region
      %70 = dma.done [#allocation4], 32768
    $region69: #{local_sage_plus_forward.2} parent=1 // pred_fallthru
      _
    %v71 = vld [vmem:[%s0] sm:$0xff]
    %v72 = vld [vmem:[%s0 + $0x8] sm:$0xff]
    %v73 = vld [vmem:[%s1] sm:$0xff]
    %v74 = vld [vmem:[%s1 + $0x8] sm:$0xff]
    %v75 = vld [vmem:[%s4] sm:$0xff]
    %v76 = vld [vmem:[%s4 + $0x8] sm:$0xff]
    %vm77 = vcmask 130048
    %v79 = vsel %vm77, %v71, 0
    %v82 = vsel %vm77, %v72, 0
    %84 = vmatprep.subr.mxu0 0.0
    %85 = vmatpush1.msra.mxu0 %v75
    %86 = vmatprep.subr.mxu0 0.0
    %87 = vmatpush1.msra.mxu0 %v76
    %88 = vmatprep.subr.mxu0 0.0
    %89 = vmatpush1.msra.mxu0 0.0
    %90 = vmatprep.subr.mxu0 0.0
    %91 = vmatpush1.msra.mxu0 0.0
    %92 = vmatprep.subr.mxu0 0.0
    %93 = vmatpush1.msra.mxu0 0.0
    %94 = vmatprep.subr.mxu0 0.0
    %95 = vmatpush1.msra.mxu0 0.0
    %96 = vmatprep.subr.mxu0 0.0
    %97 = vmatpush1.msra.mxu0 0.0
    %98 = vmatprep.subr.mxu0 0.0
    %99 = vmatpush1.msra.mxu0 0.0
    %100 = vmatprep.subr.mxu0 0.0
    %101 = vmatpush1.msra.mxu0 0.0
    %102 = vmatprep.subr.mxu0 0.0
    %103 = vmatpush1.msra.mxu0 0.0
    %104 = vmatprep.subr.mxu0 0.0
    %105 = vmatpush1.msra.mxu0 0.0
    %106 = vmatprep.subr.mxu0 0.0
    %107 = vmatpush1.msra.mxu0 0.0
    %108 = vmatprep.subr.mxu0 0.0
    %109 = vmatpush1.msra.mxu0 0.0
    %110 = vmatprep.subr.mxu0 0.0
    %111 = vmatpush1.msra.mxu0 0.0
    %112 = vmatprep.subr.mxu0 0.0
    %113 = vmatpush1.msra.mxu0 0.0
    %114 = vmatprep.subr.mxu0 0.0
    %115 = vmatpush1.msra.mxu0 0.0
    %116 = vmatprep.subr.mxu0 0.0
    %117 = vmatpush1.msra.mxu0 0.0
    %118 = vmatprep.subr.mxu0 0.0
    %119 = vmatpush1.msra.mxu0 0.0
    %120 = vmatprep.subr.mxu0 0.0
    %121 = vmatpush1.msra.mxu0 0.0
    %122 = vmatprep.subr.mxu0 0.0
    %123 = vmatpush1.msra.mxu0 0.0
    %124 = vmatprep.subr.mxu0 0.0
    %125 = vmatpush1.msra.mxu0 0.0
    %126 = vmatprep.subr.mxu0 0.0
    %127 = vmatpush1.msra.mxu0 0.0
    %128 = vmatprep.subr.mxu0 0.0
    %129 = vmatpush1.msra.mxu0 0.0
    %130 = vmatprep.subr.mxu0 0.0
    %131 = vmatpush1.msra.mxu0 0.0
    %132 = vmatprep.subr.mxu0 0.0
    %133 = vmatpush1.msra.mxu0 0.0
    %134 = vmatprep.subr.mxu0 0.0
    %135 = vmatpush1.msra.mxu0 0.0
    %136 = vmatprep.subr.mxu0 0.0
    %137 = vmatpush1.msra.mxu0 0.0
    %138 = vmatprep.subr.mxu0 0.0
    %139 = vmatpush1.msra.mxu0 0.0
    %140 = vmatprep.subr.mxu0 0.0
    %141 = vmatpush1.msra.mxu0 0.0
    %142 = vmatprep.subr.mxu0 0.0
    %143 = vmatpush1.msra.mxu0 0.0
    %144 = vmatprep.subr.mxu0 0.0
    %145 = vmatpush1.msra.mxu0 0.0
    %146 = vmatprep.subr.mxu0 0.0
    %147 = vmatpush1.msra.mxu0 0.0
    %148 = vmatprep.mubr.f32.mxu0 0.0
    %149 = vmatmul.mubr.f32.gmra.mrb[0].mxu0 %v79
    %v150 = vpop.f32.mrb[0].mxu0
    %v151 = vadd.f32 0.0, %v150
    %v152 = vpop.f32.mrb[0].mxu0
    %153 = vmatprep.mubr.f32.mxu0 0.0
    %154 = vmatmul.mubr.f32.gmra.mrb[0].mxu0 %v82
    %v155 = vpop.f32.mrb[0].mxu0
    %v156 = vadd.f32 0.0, %v155
    %v157 = vpop.f32.mrb[0].mxu0
    %158 = vdwg.mxu0
    %v159 = vld [vmem:[%s5] sm:$0x1]
    %v161 = vlaneseq
    %v162 = vshrl.u32 %v161, 7
    %v163 = vsub.s32 0, %v162
    %v164 = vrot.slane %v159, %v163
    %v167 = vsel %vm77, %v73, 0
    %v170 = vsel %vm77, %v74, 0
    %172 = vmatprep.subr.mxu0 0.0
    %173 = vmatpush1.msra.mxu0 %v151
    %174 = vmatprep.subr.mxu0 0.0
    %175 = vmatpush1.msra.mxu0 %v156
    %176 = vmatprep.subr.mxu0 0.0
    %177 = vmatpush1.msra.mxu0 0.0
    %178 = vmatprep.subr.mxu0 0.0
    %179 = vmatpush1.msra.mxu0 0.0
    %180 = vmatprep.subr.mxu0 0.0
    %181 = vmatpush1.msra.mxu0 0.0
    %182 = vmatprep.subr.mxu0 0.0
    %183 = vmatpush1.msra.mxu0 0.0
    %184 = vmatprep.subr.mxu0 0.0
    %185 = vmatpush1.msra.mxu0 0.0
    %186 = vmatprep.subr.mxu0 0.0
    %187 = vmatpush1.msra.mxu0 0.0
    %188 = vmatprep.subr.mxu0 0.0
    %189 = vmatpush1.msra.mxu0 0.0
    %190 = vmatprep.subr.mxu0 0.0
    %191 = vmatpush1.msra.mxu0 0.0
    %192 = vmatprep.subr.mxu0 0.0
    %193 = vmatpush1.msra.mxu0 0.0
    %194 = vmatprep.subr.mxu0 0.0
    %195 = vmatpush1.msra.mxu0 0.0
    %196 = vmatprep.subr.mxu0 0.0
    %197 = vmatpush1.msra.mxu0 0.0
    %198 = vmatprep.subr.mxu0 0.0
    %199 = vmatpush1.msra.mxu0 0.0
    %200 = vmatprep.subr.mxu0 0.0
    %201 = vmatpush1.msra.mxu0 0.0
    %202 = vmatprep.subr.mxu0 0.0
    %203 = vmatpush1.msra.mxu0 0.0
    %204 = vmatprep.subr.mxu0 0.0
    %205 = vmatpush1.msra.mxu0 0.0
    %206 = vmatprep.subr.mxu0 0.0
    %207 = vmatpush1.msra.mxu0 0.0
    %208 = vmatprep.subr.mxu0 0.0
    %209 = vmatpush1.msra.mxu0 0.0
    %210 = vmatprep.subr.mxu0 0.0
    %211 = vmatpush1.msra.mxu0 0.0
    %212 = vmatprep.subr.mxu0 0.0
    %213 = vmatpush1.msra.mxu0 0.0
    %214 = vmatprep.subr.mxu0 0.0
    %215 = vmatpush1.msra.mxu0 0.0
    %216 = vmatprep.subr.mxu0 0.0
    %217 = vmatpush1.msra.mxu0 0.0
    %218 = vmatprep.subr.mxu0 0.0
    %219 = vmatpush1.msra.mxu0 0.0
    %220 = vmatprep.subr.mxu0 0.0
    %221 = vmatpush1.msra.mxu0 0.0
    %222 = vmatprep.subr.mxu0 0.0
    %223 = vmatpush1.msra.mxu0 0.0
    %224 = vmatprep.subr.mxu0 0.0
    %225 = vmatpush1.msra.mxu0 0.0
    %226 = vmatprep.subr.mxu0 0.0
    %227 = vmatpush1.msra.mxu0 0.0
    %228 = vmatprep.subr.mxu0 0.0
    %229 = vmatpush1.msra.mxu0 0.0
    %230 = vmatprep.subr.mxu0 0.0
    %231 = vmatpush1.msra.mxu0 0.0
    %232 = vmatprep.subr.mxu0 0.0
    %233 = vmatpush1.msra.mxu0 0.0
    %234 = vmatprep.subr.mxu0 0.0
    %235 = vmatpush1.msra.mxu0 0.0
    %236 = vmatprep.mubr.f32.mxu0 0.0
    %237 = vmatmul.mubr.f32.gmra.mrb[0].mxu0 %v167
    %v238 = vpop.f32.mrb[0].mxu0
    %v239 = vadd.f32 %v164, %v238
    %v240 = vpop.f32.mrb[0].mxu0
    %241 = vmatprep.mubr.f32.mxu0 0.0
    %242 = vmatmul.mubr.f32.gmra.mrb[0].mxu0 %v170
    %v243 = vpop.f32.mrb[0].mxu0
    %v244 = vadd.f32 %v164, %v243
    %v245 = vpop.f32.mrb[0].mxu0
    %246 = vdwg.mxu0
    %v247 = vmax.f32 %v239, 0.0
    %v248 = vmax.f32 %v244, 0.0
    %v249 = vld [vmem:[%s6] sm:$0xff]
    %v250 = vld [vmem:[%s6 + $0x8] sm:$0xff]
    %v251 = vld [vmem:[%s6 + $0x10] sm:$0xff]
    %v252 = vld [vmem:[%s6 + $0x18] sm:$0xff]
    %vm253 = vcmask 261120
    %v255 = vsel %vm253, %v247, 0
    %v258 = vsel %vm253, %v248, 0
    %260 = vmatprep.subr.mxu0 0.0
    %261 = vmatpush1.msra.mxu0 %v249
    %262 = vmatprep.subr.mxu0 0.0
    %263 = vmatpush1.msra.mxu0 %v250
    %264 = vmatprep.subr.mxu0 0.0
    %265 = vmatpush1.msra.mxu0 %v251
    %266 = vmatprep.subr.mxu0 0.0
    %267 = vmatpush1.msra.mxu0 %v252
    %268 = vmatprep.subr.mxu0 0.0
    %269 = vmatpush1.msra.mxu0 0.0
    %270 = vmatprep.subr.mxu0 0.0
    %271 = vmatpush1.msra.mxu0 0.0
    %272 = vmatprep.subr.mxu0 0.0
    %273 = vmatpush1.msra.mxu0 0.0
    %274 = vmatprep.subr.mxu0 0.0
    %275 = vmatpush1.msra.mxu0 0.0
    %276 = vmatprep.subr.mxu0 0.0
    %277 = vmatpush1.msra.mxu0 0.0
    %278 = vmatprep.subr.mxu0 0.0
    %279 = vmatpush1.msra.mxu0 0.0
    %280 = vmatprep.subr.mxu0 0.0
    %281 = vmatpush1.msra.mxu0 0.0
    %282 = vmatprep.subr.mxu0 0.0
    %283 = vmatpush1.msra.mxu0 0.0
    %284 = vmatprep.subr.mxu0 0.0
    %285 = vmatpush1.msra.mxu0 0.0
    %286 = vmatprep.subr.mxu0 0.0
    %287 = vmatpush1.msra.mxu0 0.0
    %288 = vmatprep.subr.mxu0 0.0
    %289 = vmatpush1.msra.mxu0 0.0
    %290 = vmatprep.subr.mxu0 0.0
    %291 = vmatpush1.msra.mxu0 0.0
    %292 = vmatprep.subr.mxu0 0.0
    %293 = vmatpush1.msra.mxu0 0.0
    %294 = vmatprep.subr.mxu0 0.0
    %295 = vmatpush1.msra.mxu0 0.0
    %296 = vmatprep.subr.mxu0 0.0
    %297 = vmatpush1.msra.mxu0 0.0
    %298 = vmatprep.subr.mxu0 0.0
    %299 = vmatpush1.msra.mxu0 0.0
    %300 = vmatprep.subr.mxu0 0.0
    %301 = vmatpush1.msra.mxu0 0.0
    %302 = vmatprep.subr.mxu0 0.0
    %303 = vmatpush1.msra.mxu0 0.0
    %304 = vmatprep.subr.mxu0 0.0
    %305 = vmatpush1.msra.mxu0 0.0
    %306 = vmatprep.subr.mxu0 0.0
    %307 = vmatpush1.msra.mxu0 0.0
    %308 = vmatprep.subr.mxu0 0.0
    %309 = vmatpush1.msra.mxu0 0.0
    %310 = vmatprep.subr.mxu0 0.0
    %311 = vmatpush1.msra.mxu0 0.0
    %312 = vmatprep.subr.mxu0 0.0
    %313 = vmatpush1.msra.mxu0 0.0
    %314 = vmatprep.subr.mxu0 0.0
    %315 = vmatpush1.msra.mxu0 0.0
    %316 = vmatprep.subr.mxu0 0.0
    %317 = vmatpush1.msra.mxu0 0.0
    %318 = vmatprep.subr.mxu0 0.0
    %319 = vmatpush1.msra.mxu0 0.0
    %320 = vmatprep.subr.mxu0 0.0
    %321 = vmatpush1.msra.mxu0 0.0
    %322 = vmatprep.subr.mxu0 0.0
    %323 = vmatpush1.msra.mxu0 0.0
    %324 = vmatprep.mubr.f32.mxu0 0.0
    %325 = vmatmul.mubr.f32.gmra.mrb[0].mxu0 %v255
    %v326 = vpop.f32.mrb[0].mxu0
    %v327 = vadd.f32 0.0, %v326
    %v328 = vpop.f32.mrb[0].mxu0
    %329 = vmatprep.mubr.f32.mxu0 0.0
    %330 = vmatmul.mubr.f32.gmra.mrb[0].mxu0 %v258
    %v331 = vpop.f32.mrb[0].mxu0
    %v332 = vadd.f32 0.0, %v331
    %v333 = vpop.f32.mrb[0].mxu0
    %334 = vdwg.mxu0
    %v335 = vld [vmem:[%s7] sm:$0x1]
    %v337 = vlaneseq
    %v338 = vshrl.u32 %v337, 7
    %v339 = vsub.s32 0, %v338
    %v340 = vrot.slane %v335, %v339
    %342 = vmatprep.subr.mxu0 0.0
    %343 = vmatpush1.msra.mxu0 %v327
    %344 = vmatprep.subr.mxu0 0.0
    %345 = vmatpush1.msra.mxu0 %v332
    %346 = vmatprep.subr.mxu0 0.0
    %347 = vmatpush1.msra.mxu0 0.0
    %348 = vmatprep.subr.mxu0 0.0
    %349 = vmatpush1.msra.mxu0 0.0
    %350 = vmatprep.subr.mxu0 0.0
    %351 = vmatpush1.msra.mxu0 0.0
    %352 = vmatprep.subr.mxu0 0.0
    %353 = vmatpush1.msra.mxu0 0.0
    %354 = vmatprep.subr.mxu0 0.0
    %355 = vmatpush1.msra.mxu0 0.0
    %356 = vmatprep.subr.mxu0 0.0
    %357 = vmatpush1.msra.mxu0 0.0
    %358 = vmatprep.subr.mxu0 0.0
    %359 = vmatpush1.msra.mxu0 0.0
    %360 = vmatprep.subr.mxu0 0.0
    %361 = vmatpush1.msra.mxu0 0.0
    %362 = vmatprep.subr.mxu0 0.0
    %363 = vmatpush1.msra.mxu0 0.0
    %364 = vmatprep.subr.mxu0 0.0
    %365 = vmatpush1.msra.mxu0 0.0
    %366 = vmatprep.subr.mxu0 0.0
    %367 = vmatpush1.msra.mxu0 0.0
    %368 = vmatprep.subr.mxu0 0.0
    %369 = vmatpush1.msra.mxu0 0.0
    %370 = vmatprep.subr.mxu0 0.0
    %371 = vmatpush1.msra.mxu0 0.0
    %372 = vmatprep.subr.mxu0 0.0
    %373 = vmatpush1.msra.mxu0 0.0
    %374 = vmatprep.subr.mxu0 0.0
    %375 = vmatpush1.msra.mxu0 0.0
    %376 = vmatprep.subr.mxu0 0.0
    %377 = vmatpush1.msra.mxu0 0.0
    %378 = vmatprep.subr.mxu0 0.0
    %379 = vmatpush1.msra.mxu0 0.0
    %380 = vmatprep.subr.mxu0 0.0
    %381 = vmatpush1.msra.mxu0 0.0
    %382 = vmatprep.subr.mxu0 0.0
    %383 = vmatpush1.msra.mxu0 0.0
    %384 = vmatprep.subr.mxu0 0.0
    %385 = vmatpush1.msra.mxu0 0.0
    %386 = vmatprep.subr.mxu0 0.0
    %387 = vmatpush1.msra.mxu0 0.0
    %388 = vmatprep.subr.mxu0 0.0
    %389 = vmatpush1.msra.mxu0 0.0
    %390 = vmatprep.subr.mxu0 0.0
    %391 = vmatpush1.msra.mxu0 0.0
    %392 = vmatprep.subr.mxu0 0.0
    %393 = vmatpush1.msra.mxu0 0.0
    %394 = vmatprep.subr.mxu0 0.0
    %395 = vmatpush1.msra.mxu0 0.0
    %396 = vmatprep.subr.mxu0 0.0
    %397 = vmatpush1.msra.mxu0 0.0
    %398 = vmatprep.subr.mxu0 0.0
    %399 = vmatpush1.msra.mxu0 0.0
    %400 = vmatprep.subr.mxu0 0.0
    %401 = vmatpush1.msra.mxu0 0.0
    %402 = vmatprep.subr.mxu0 0.0
    %403 = vmatpush1.msra.mxu0 0.0
    %404 = vmatprep.subr.mxu0 0.0
    %405 = vmatpush1.msra.mxu0 0.0
    %406 = vmatprep.mubr.f32.mxu0 0.0
    %407 = vmatmul.mubr.f32.gmra.mrb[0].mxu0 %v167
    %v408 = vpop.f32.mrb[0].mxu0
    %v409 = vadd.f32 %v340, %v408
    %v410 = vpop.f32.mrb[0].mxu0
    %411 = vmatprep.mubr.f32.mxu0 0.0
    %412 = vmatmul.mubr.f32.gmra.mrb[0].mxu0 %v170
    %v413 = vpop.f32.mrb[0].mxu0
    %v414 = vadd.f32 %v340, %v413
    %v415 = vpop.f32.mrb[0].mxu0
    %416 = vdwg.mxu0
    %v417 = vmax.f32 %v409, 0.0
    %v418 = vmax.f32 %v414, 0.0
    %v419 = vld [vmem:[%s2] sm:$0xff]
    %v421 = vsel %vm77, %v419, 0
    %423 = vmatprep.subr.mxu0 0.0
    %424 = vmatpush1.msra.mxu0 %v417
    %425 = vmatprep.subr.mxu0 0.0
    %426 = vmatpush1.msra.mxu0 %v418
    %427 = vmatprep.subr.mxu0 0.0
    %428 = vmatpush1.msra.mxu0 0.0
    %429 = vmatprep.subr.mxu0 0.0
    %430 = vmatpush1.msra.mxu0 0.0
    %431 = vmatprep.subr.mxu0 0.0
    %432 = vmatpush1.msra.mxu0 0.0
    %433 = vmatprep.subr.mxu0 0.0
    %434 = vmatpush1.msra.mxu0 0.0
    %435 = vmatprep.subr.mxu0 0.0
    %436 = vmatpush1.msra.mxu0 0.0
    %437 = vmatprep.subr.mxu0 0.0
    %438 = vmatpush1.msra.mxu0 0.0
    %439 = vmatprep.subr.mxu0 0.0
    %440 = vmatpush1.msra.mxu0 0.0
    %441 = vmatprep.subr.mxu0 0.0
    %442 = vmatpush1.msra.mxu0 0.0
    %443 = vmatprep.subr.mxu0 0.0
    %444 = vmatpush1.msra.mxu0 0.0
    %445 = vmatprep.subr.mxu0 0.0
    %446 = vmatpush1.msra.mxu0 0.0
    %447 = vmatprep.subr.mxu0 0.0
    %448 = vmatpush1.msra.mxu0 0.0
    %449 = vmatprep.subr.mxu0 0.0
    %450 = vmatpush1.msra.mxu0 0.0
    %451 = vmatprep.subr.mxu0 0.0
    %452 = vmatpush1.msra.mxu0 0.0
    %453 = vmatprep.subr.mxu0 0.0
    %454 = vmatpush1.msra.mxu0 0.0
    %455 = vmatprep.subr.mxu0 0.0
    %456 = vmatpush1.msra.mxu0 0.0
    %457 = vmatprep.subr.mxu0 0.0
    %458 = vmatpush1.msra.mxu0 0.0
    %459 = vmatprep.subr.mxu0 0.0
    %460 = vmatpush1.msra.mxu0 0.0
    %461 = vmatprep.subr.mxu0 0.0
    %462 = vmatpush1.msra.mxu0 0.0
    %463 = vmatprep.subr.mxu0 0.0
    %464 = vmatpush1.msra.mxu0 0.0
    %465 = vmatprep.subr.mxu0 0.0
    %466 = vmatpush1.msra.mxu0 0.0
    %467 = vmatprep.subr.mxu0 0.0
    %468 = vmatpush1.msra.mxu0 0.0
    %469 = vmatprep.subr.mxu0 0.0
    %470 = vmatpush1.msra.mxu0 0.0
    %471 = vmatprep.subr.mxu0 0.0
    %472 = vmatpush1.msra.mxu0 0.0
    %473 = vmatprep.subr.mxu0 0.0
    %474 = vmatpush1.msra.mxu0 0.0
    %475 = vmatprep.subr.mxu0 0.0
    %476 = vmatpush1.msra.mxu0 0.0
    %477 = vmatprep.subr.mxu0 0.0
    %478 = vmatpush1.msra.mxu0 0.0
    %479 = vmatprep.subr.mxu0 0.0
    %480 = vmatpush1.msra.mxu0 0.0
    %481 = vmatprep.subr.mxu0 0.0
    %482 = vmatpush1.msra.mxu0 0.0
    %483 = vmatprep.subr.mxu0 0.0
    %484 = vmatpush1.msra.mxu0 0.0
    %485 = vmatprep.subr.mxu0 0.0
    %486 = vmatpush1.msra.mxu0 0.0
    %487 = vmatprep.mubr.f32.mxu0 0.0
    %488 = vmatmul.mubr.f32.gmra.mrb[0].mxu0 %v421
    %v489 = vpop.f32.mrb[0].mxu0
    %v490 = vadd.f32 0.0, %v489
    %v491 = vpop.f32.mrb[0].mxu0
    %492 = vdwg.mxu0
    %v493 = vld [vmem:[%s8] sm:$0xff]
    %v494 = vld [vmem:[%s8 + $0x8] sm:$0xff]
    %v495 = vld [vmem:[#allocation2] sm:$0x1]
    %v497 = vlaneseq
    %v498 = vshrl.u32 %v497, 7
    %v499 = vsub.s32 0, %v498
    %v500 = vrot.slane %v495, %v499
    %v503 = vsel %vm77, %v490, 0
    %505 = vmatprep.subr.mxu0 0.0
    %506 = vmatpush1.msra.mxu0 %v493
    %507 = vmatprep.subr.mxu0 0.0
    %508 = vmatpush1.msra.mxu0 %v494
    %509 = vmatprep.subr.mxu0 0.0
    %510 = vmatpush1.msra.mxu0 0.0
    %511 = vmatprep.subr.mxu0 0.0
    %512 = vmatpush1.msra.mxu0 0.0
    %513 = vmatprep.subr.mxu0 0.0
    %514 = vmatpush1.msra.mxu0 0.0
    %515 = vmatprep.subr.mxu0 0.0
    %516 = vmatpush1.msra.mxu0 0.0
    %517 = vmatprep.subr.mxu0 0.0
    %518 = vmatpush1.msra.mxu0 0.0
    %519 = vmatprep.subr.mxu0 0.0
    %520 = vmatpush1.msra.mxu0 0.0
    %521 = vmatprep.subr.mxu0 0.0
    %522 = vmatpush1.msra.mxu0 0.0
    %523 = vmatprep.subr.mxu0 0.0
    %524 = vmatpush1.msra.mxu0 0.0
    %525 = vmatprep.subr.mxu0 0.0
    %526 = vmatpush1.msra.mxu0 0.0
    %527 = vmatprep.subr.mxu0 0.0
    %528 = vmatpush1.msra.mxu0 0.0
    %529 = vmatprep.subr.mxu0 0.0
    %530 = vmatpush1.msra.mxu0 0.0
    %531 = vmatprep.subr.mxu0 0.0
    %532 = vmatpush1.msra.mxu0 0.0
    %533 = vmatprep.subr.mxu0 0.0
    %534 = vmatpush1.msra.mxu0 0.0
    %535 = vmatprep.subr.mxu0 0.0
    %536 = vmatpush1.msra.mxu0 0.0
    %537 = vmatprep.subr.mxu0 0.0
    %538 = vmatpush1.msra.mxu0 0.0
    %539 = vmatprep.subr.mxu0 0.0
    %540 = vmatpush1.msra.mxu0 0.0
    %541 = vmatprep.subr.mxu0 0.0
    %542 = vmatpush1.msra.mxu0 0.0
    %543 = vmatprep.subr.mxu0 0.0
    %544 = vmatpush1.msra.mxu0 0.0
    %545 = vmatprep.subr.mxu0 0.0
    %546 = vmatpush1.msra.mxu0 0.0
    %547 = vmatprep.subr.mxu0 0.0
    %548 = vmatpush1.msra.mxu0 0.0
    %549 = vmatprep.subr.mxu0 0.0
    %550 = vmatpush1.msra.mxu0 0.0
    %551 = vmatprep.subr.mxu0 0.0
    %552 = vmatpush1.msra.mxu0 0.0
    %553 = vmatprep.subr.mxu0 0.0
    %554 = vmatpush1.msra.mxu0 0.0
    %555 = vmatprep.subr.mxu0 0.0
    %556 = vmatpush1.msra.mxu0 0.0
    %557 = vmatprep.subr.mxu0 0.0
    %558 = vmatpush1.msra.mxu0 0.0
    %559 = vmatprep.subr.mxu0 0.0
    %560 = vmatpush1.msra.mxu0 0.0
    %561 = vmatprep.subr.mxu0 0.0
    %562 = vmatpush1.msra.mxu0 0.0
    %563 = vmatprep.subr.mxu0 0.0
    %564 = vmatpush1.msra.mxu0 0.0
    %565 = vmatprep.subr.mxu0 0.0
    %566 = vmatpush1.msra.mxu0 0.0
    %567 = vmatprep.subr.mxu0 0.0
    %568 = vmatpush1.msra.mxu0 0.0
    %569 = vmatprep.mubr.f32.mxu0 0.0
    %570 = vmatmul.mubr.f32.gmra.mrb[0].mxu0 %v503
    %v571 = vpop.f32.mrb[0].mxu0
    %v572 = vadd.f32 %v500, %v571
    %v573 = vpop.f32.mrb[0].mxu0
    %574 = vdwg.mxu0
    %v575 = vmax.f32 %v572, 0.0
    %vm576 = vcmask 7168
    %577 = vst.msk [vmem:[%s16] sm:$0xff] %vm576, %v575
    %v578 = vld [vmem:[%s3] sm:$0xff]
    %v579 = vld [vmem:[%s3 + $0x8] sm:$0xff]
    %v580 = vadd.f32 %v417, %v578
    %v581 = vadd.f32 %v418, %v579
    %v582 = vld [vmem:[%s10] sm:$0xff]
    %v583 = vld [vmem:[%s10 + $0x8] sm:$0xff]
    %v584 = vld [vmem:[%s10 + $0x10] sm:$0xff]
    %v585 = vld [vmem:[%s10 + $0x18] sm:$0xff]
    %v586 = vld [vmem:[%s11] sm:$0x3]
    %v588 = vlaneseq
    %v589 = vshrl.u32 %v588, 7
    %v590 = vsub.s32 0, %v589
    %v591 = vrot.slane %v586, %v590
    %v592 = vlaneseq
    %v593 = vshrl.u32 %v592, 7
    %v594 = vsub.s32 1, %v593
    %v595 = vrot.slane %v586, %v594
    %v599 = vsel %vm77, %v580, 0
    %v602 = vsel %vm77, %v581, 0
    %604 = vmatprep.subr.mxu0 %v583
    %605 = vmatpush1.msra.mxu0 %v582
    %606 = vmatprep.subr.mxu0 %v585
    %607 = vmatpush1.msra.mxu0 %v584
    %608 = vmatprep.subr.mxu0 0.0
    %609 = vmatpush1.msra.mxu0 0.0
    %610 = vmatprep.subr.mxu0 0.0
    %611 = vmatpush1.msra.mxu0 0.0
    %612 = vmatprep.subr.mxu0 0.0
    %613 = vmatpush1.msra.mxu0 0.0
    %614 = vmatprep.subr.mxu0 0.0
    %615 = vmatpush1.msra.mxu0 0.0
    %616 = vmatprep.subr.mxu0 0.0
    %617 = vmatpush1.msra.mxu0 0.0
    %618 = vmatprep.subr.mxu0 0.0
    %619 = vmatpush1.msra.mxu0 0.0
    %620 = vmatprep.subr.mxu0 0.0
    %621 = vmatpush1.msra.mxu0 0.0
    %622 = vmatprep.subr.mxu0 0.0
    %623 = vmatpush1.msra.mxu0 0.0
    %624 = vmatprep.subr.mxu0 0.0
    %625 = vmatpush1.msra.mxu0 0.0
    %626 = vmatprep.subr.mxu0 0.0
    %627 = vmatpush1.msra.mxu0 0.0
    %628 = vmatprep.subr.mxu0 0.0
    %629 = vmatpush1.msra.mxu0 0.0
    %630 = vmatprep.subr.mxu0 0.0
    %631 = vmatpush1.msra.mxu0 0.0
    %632 = vmatprep.subr.mxu0 0.0
    %633 = vmatpush1.msra.mxu0 0.0
    %634 = vmatprep.subr.mxu0 0.0
    %635 = vmatpush1.msra.mxu0 0.0
    %636 = vmatprep.subr.mxu0 0.0
    %637 = vmatpush1.msra.mxu0 0.0
    %638 = vmatprep.subr.mxu0 0.0
    %639 = vmatpush1.msra.mxu0 0.0
    %640 = vmatprep.subr.mxu0 0.0
    %641 = vmatpush1.msra.mxu0 0.0
    %642 = vmatprep.subr.mxu0 0.0
    %643 = vmatpush1.msra.mxu0 0.0
    %644 = vmatprep.subr.mxu0 0.0
    %645 = vmatpush1.msra.mxu0 0.0
    %646 = vmatprep.subr.mxu0 0.0
    %647 = vmatpush1.msra.mxu0 0.0
    %648 = vmatprep.subr.mxu0 0.0
    %649 = vmatpush1.msra.mxu0 0.0
    %650 = vmatprep.subr.mxu0 0.0
    %651 = vmatpush1.msra.mxu0 0.0
    %652 = vmatprep.subr.mxu0 0.0
    %653 = vmatpush1.msra.mxu0 0.0
    %654 = vmatprep.subr.mxu0 0.0
    %655 = vmatpush1.msra.mxu0 0.0
    %656 = vmatprep.subr.mxu0 0.0
    %657 = vmatpush1.msra.mxu0 0.0
    %658 = vmatprep.subr.mxu0 0.0
    %659 = vmatpush1.msra.mxu0 0.0
    %660 = vmatprep.subr.mxu0 0.0
    %661 = vmatpush1.msra.mxu0 0.0
    %662 = vmatprep.subr.mxu0 0.0
    %663 = vmatpush1.msra.mxu0 0.0
    %664 = vmatprep.subr.mxu0 0.0
    %665 = vmatpush1.msra.mxu0 0.0
    %666 = vmatprep.subr.mxu0 0.0
    %667 = vmatpush1.msra.mxu0 0.0
    %668 = vmatprep.mubr.f32.mxu0 0.0
    %669 = vmatmul.mubr.f32.gmra.mrb[0].mxu0 %v599
    %v670 = vpop.f32.mrb[0].mxu0
    %v671 = vadd.f32 %v591, %v670
    %v672 = vpop.f32.mrb[0].mxu0
    %v673 = vadd.f32 %v595, %v672
    %674 = vmatprep.mubr.f32.mxu0 0.0
    %675 = vmatmul.mubr.f32.gmra.mrb[0].mxu0 %v602
    %v676 = vpop.f32.mrb[0].mxu0
    %v677 = vadd.f32 %v591, %v676
    %v678 = vpop.f32.mrb[0].mxu0
    %v679 = vadd.f32 %v595, %v678
    %680 = vdwg.mxu0
    %v681 = vmax.f32 %v671, 0.0
    %v682 = vmax.f32 %v673, 0.0
    %v683 = vmax.f32 %v677, 0.0
    %v684 = vmax.f32 %v679, 0.0
    %v685 = vld [vmem:[#allocation3] sm:$0xff]
    %v686 = vld [vmem:[#allocation3 + $0x8] sm:$0xff]
    %v687 = vld [vmem:[#allocation3 + $0x10] sm:$0xff]
    %v688 = vld [vmem:[#allocation3 + $0x18] sm:$0xff]
    %v689 = vld [vmem:[#allocation3 + $0x20] sm:$0xff]
    %v690 = vld [vmem:[#allocation3 + $0x28] sm:$0xff]
    %v691 = vld [vmem:[#allocation3 + $0x30] sm:$0xff]
    %v692 = vld [vmem:[#allocation3 + $0x38] sm:$0xff]
    %v693 = vld [vmem:[#allocation3 + $0x40] sm:$0xff]
    %v694 = vld [vmem:[#allocation3 + $0x48] sm:$0xff]
    %v695 = vld [vmem:[#allocation3 + $0x50] sm:$0xff]
    %v696 = vld [vmem:[#allocation3 + $0x58] sm:$0xff]
    %v697 = vld [vmem:[#allocation3 + $0x60] sm:$0xff]
    %v698 = vld [vmem:[#allocation3 + $0x68] sm:$0xff]
    %v699 = vld [vmem:[#allocation3 + $0x70] sm:$0xff]
    %v700 = vld [vmem:[#allocation3 + $0x78] sm:$0xff]
    %v701 = vld [vmem:[#allocation3 + $0x80] sm:$0xff]
    %v702 = vld [vmem:[#allocation3 + $0x88] sm:$0xff]
    %v703 = vld [vmem:[#allocation3 + $0x90] sm:$0xff]
    %v704 = vld [vmem:[#allocation3 + $0x98] sm:$0xff]
    %v705 = vld [vmem:[#allocation3 + $0xa0] sm:$0xff]
    %v706 = vld [vmem:[#allocation3 + $0xa8] sm:$0xff]
    %v707 = vld [vmem:[#allocation3 + $0xb0] sm:$0xff]
    %v708 = vld [vmem:[#allocation3 + $0xb8] sm:$0xff]
    %v709 = vld [vmem:[#allocation3 + $0xc0] sm:$0xff]
    %v710 = vld [vmem:[#allocation3 + $0xc8] sm:$0xff]
    %v711 = vld [vmem:[#allocation3 + $0xd0] sm:$0xff]
    %v712 = vld [vmem:[#allocation3 + $0xd8] sm:$0xff]
    %v713 = vld [vmem:[#allocation3 + $0xe0] sm:$0xff]
    %v714 = vld [vmem:[#allocation3 + $0xe8] sm:$0xff]
    %v715 = vld [vmem:[#allocation3 + $0xf0] sm:$0xff]
    %v716 = vld [vmem:[#allocation3 + $0xf8] sm:$0xff]
    %v717 = vld [vmem:[#allocation3 + $0x100] sm:$0xff]
    %v718 = vld [vmem:[#allocation3 + $0x108] sm:$0xff]
    %v719 = vld [vmem:[#allocation3 + $0x110] sm:$0xff]
    %v720 = vld [vmem:[#allocation3 + $0x118] sm:$0xff]
    %v721 = vld [vmem:[#allocation3 + $0x120] sm:$0xff]
    %v722 = vld [vmem:[#allocation3 + $0x128] sm:$0xff]
    %v723 = vld [vmem:[#allocation3 + $0x130] sm:$0xff]
    %v724 = vld [vmem:[#allocation3 + $0x138] sm:$0xff]
    %v725 = vld [vmem:[#allocation3 + $0x140] sm:$0xff]
    %v726 = vld [vmem:[#allocation3 + $0x148] sm:$0xff]
    %v727 = vld [vmem:[#allocation3 + $0x150] sm:$0xff]
    %v728 = vld [vmem:[#allocation3 + $0x158] sm:$0xff]
    %v729 = vld [vmem:[#allocation3 + $0x160] sm:$0xff]
    %v730 = vld [vmem:[#allocation3 + $0x168] sm:$0xff]
    %v731 = vld [vmem:[#allocation3 + $0x170] sm:$0xff]
    %v732 = vld [vmem:[#allocation3 + $0x178] sm:$0xff]
    %v733 = vld [vmem:[#allocation3 + $0x180] sm:$0xff]
    %v734 = vld [vmem:[#allocation3 + $0x188] sm:$0xff]
    %v735 = vld [vmem:[#allocation3 + $0x190] sm:$0xff]
    %v736 = vld [vmem:[#allocation3 + $0x198] sm:$0xff]
    %v737 = vld [vmem:[#allocation3 + $0x1a0] sm:$0xff]
    %v738 = vld [vmem:[#allocation3 + $0x1a8] sm:$0xff]
    %v739 = vld [vmem:[#allocation3 + $0x1b0] sm:$0xff]
    %v740 = vld [vmem:[#allocation3 + $0x1b8] sm:$0xff]
    %v741 = vld [vmem:[#allocation3 + $0x1c0] sm:$0xff]
    %v742 = vld [vmem:[#allocation3 + $0x1c8] sm:$0xff]
    %v743 = vld [vmem:[#allocation3 + $0x1d0] sm:$0xff]
    %v744 = vld [vmem:[#allocation3 + $0x1d8] sm:$0xff]
    %v745 = vld [vmem:[#allocation3 + $0x1e0] sm:$0xff]
    %v746 = vld [vmem:[#allocation3 + $0x1e8] sm:$0xff]
    %v747 = vld [vmem:[#allocation3 + $0x1f0] sm:$0xff]
    %v748 = vld [vmem:[#allocation3 + $0x1f8] sm:$0xff]
    %v749 = vld [vmem:[#allocation3 + $0x200] sm:$0xff]
    %v750 = vld [vmem:[#allocation3 + $0x208] sm:$0xff]
    %v751 = vld [vmem:[#allocation3 + $0x210] sm:$0xff]
    %v752 = vld [vmem:[#allocation3 + $0x218] sm:$0xff]
    %v753 = vld [vmem:[#allocation3 + $0x220] sm:$0xff]
    %v754 = vld [vmem:[#allocation3 + $0x228] sm:$0xff]
    %v755 = vld [vmem:[#allocation3 + $0x230] sm:$0xff]
    %v756 = vld [vmem:[#allocation3 + $0x238] sm:$0xff]
    %v757 = vld [vmem:[#allocation3 + $0x240] sm:$0xff]
    %v758 = vld [vmem:[#allocation3 + $0x248] sm:$0xff]
    %v759 = vld [vmem:[#allocation3 + $0x250] sm:$0xff]
    %v760 = vld [vmem:[#allocation3 + $0x258] sm:$0xff]
    %v761 = vld [vmem:[#allocation3 + $0x260] sm:$0xff]
    %v762 = vld [vmem:[#allocation3 + $0x268] sm:$0xff]
    %v763 = vld [vmem:[#allocation3 + $0x270] sm:$0xff]
    %v764 = vld [vmem:[#allocation3 + $0x278] sm:$0xff]
    %v765 = vld [vmem:[#allocation3 + $0x280] sm:$0xff]
    %v766 = vld [vmem:[#allocation3 + $0x288] sm:$0xff]
    %v767 = vld [vmem:[#allocation3 + $0x290] sm:$0xff]
    %v768 = vld [vmem:[#allocation3 + $0x298] sm:$0xff]
    %v769 = vld [vmem:[#allocation3 + $0x2a0] sm:$0xff]
    %v770 = vld [vmem:[#allocation3 + $0x2a8] sm:$0xff]
    %v771 = vld [vmem:[#allocation3 + $0x2b0] sm:$0xff]
    %v772 = vld [vmem:[#allocation3 + $0x2b8] sm:$0xff]
    %v773 = vld [vmem:[#allocation3 + $0x2c0] sm:$0xff]
    %v774 = vld [vmem:[#allocation3 + $0x2c8] sm:$0xff]
    %v775 = vld [vmem:[#allocation3 + $0x2d0] sm:$0xff]
    %v776 = vld [vmem:[#allocation3 + $0x2d8] sm:$0xff]
    %v777 = vld [vmem:[#allocation3 + $0x2e0] sm:$0xff]
    %v778 = vld [vmem:[#allocation3 + $0x2e8] sm:$0xff]
    %v779 = vld [vmem:[#allocation3 + $0x2f0] sm:$0xff]
    %v780 = vld [vmem:[#allocation3 + $0x2f8] sm:$0xff]
    %v781 = vld [vmem:[#allocation3 + $0x300] sm:$0xff]
    %v782 = vld [vmem:[#allocation3 + $0x308] sm:$0xff]
    %v783 = vld [vmem:[#allocation3 + $0x310] sm:$0xff]
    %v784 = vld [vmem:[#allocation3 + $0x318] sm:$0xff]
    %v785 = vld [vmem:[#allocation3 + $0x320] sm:$0xff]
    %v786 = vld [vmem:[#allocation3 + $0x328] sm:$0xff]
    %v787 = vld [vmem:[#allocation3 + $0x330] sm:$0xff]
    %v788 = vld [vmem:[#allocation3 + $0x338] sm:$0xff]
    %v789 = vld [vmem:[#allocation3 + $0x340] sm:$0xff]
    %v790 = vld [vmem:[#allocation3 + $0x348] sm:$0xff]
    %v791 = vld [vmem:[#allocation3 + $0x350] sm:$0xff]
    %v792 = vld [vmem:[#allocation3 + $0x358] sm:$0xff]
    %v793 = vld [vmem:[#allocation3 + $0x360] sm:$0xff]
    %v794 = vld [vmem:[#allocation3 + $0x368] sm:$0xff]
    %v795 = vld [vmem:[#allocation3 + $0x370] sm:$0xff]
    %v796 = vld [vmem:[#allocation3 + $0x378] sm:$0xff]
    %v797 = vld [vmem:[#allocation3 + $0x380] sm:$0xff]
    %v798 = vld [vmem:[#allocation3 + $0x388] sm:$0xff]
    %v799 = vld [vmem:[#allocation3 + $0x390] sm:$0xff]
    %v800 = vld [vmem:[#allocation3 + $0x398] sm:$0xff]
    %v801 = vld [vmem:[#allocation3 + $0x3a0] sm:$0xff]
    %v802 = vld [vmem:[#allocation3 + $0x3a8] sm:$0xff]
    %v803 = vld [vmem:[#allocation3 + $0x3b0] sm:$0xff]
    %v804 = vld [vmem:[#allocation3 + $0x3b8] sm:$0xff]
    %v805 = vld [vmem:[#allocation3 + $0x3c0] sm:$0xff]
    %v806 = vld [vmem:[#allocation3 + $0x3c8] sm:$0xff]
    %v807 = vld [vmem:[#allocation3 + $0x3d0] sm:$0xff]
    %v808 = vld [vmem:[#allocation3 + $0x3d8] sm:$0xff]
    %v809 = vld [vmem:[#allocation3 + $0x3e0] sm:$0xff]
    %v810 = vld [vmem:[#allocation3 + $0x3e8] sm:$0xff]
    %v811 = vld [vmem:[#allocation3 + $0x3f0] sm:$0xff]
    %v812 = vld [vmem:[#allocation3 + $0x3f8] sm:$0xff]
    %v813 = vld [vmem:[#allocation3 + $0x400] sm:$0xff]
    %v814 = vld [vmem:[#allocation3 + $0x408] sm:$0xff]
    %v815 = vld [vmem:[#allocation3 + $0x410] sm:$0xff]
    %v816 = vld [vmem:[#allocation3 + $0x418] sm:$0xff]
    %v817 = vld [vmem:[#allocation3 + $0x420] sm:$0xff]
    %v818 = vld [vmem:[#allocation3 + $0x428] sm:$0xff]
    %v819 = vld [vmem:[#allocation3 + $0x430] sm:$0xff]
    %v820 = vld [vmem:[#allocation3 + $0x438] sm:$0xff]
    %v821 = vld [vmem:[#allocation3 + $0x440] sm:$0xff]
    %v822 = vld [vmem:[#allocation3 + $0x448] sm:$0xff]
    %v823 = vld [vmem:[#allocation3 + $0x450] sm:$0xff]
    %v824 = vld [vmem:[#allocation3 + $0x458] sm:$0xff]
    %v825 = vld [vmem:[#allocation3 + $0x460] sm:$0xff]
    %v826 = vld [vmem:[#allocation3 + $0x468] sm:$0xff]
    %v827 = vld [vmem:[#allocation3 + $0x470] sm:$0xff]
    %v828 = vld [vmem:[#allocation3 + $0x478] sm:$0xff]
    %v829 = vld [vmem:[#allocation3 + $0x480] sm:$0xff]
    %v830 = vld [vmem:[#allocation3 + $0x488] sm:$0xff]
    %v831 = vld [vmem:[#allocation3 + $0x490] sm:$0xff]
    %v832 = vld [vmem:[#allocation3 + $0x498] sm:$0xff]
    %v833 = vld [vmem:[#allocation3 + $0x4a0] sm:$0xff]
    %v834 = vld [vmem:[#allocation3 + $0x4a8] sm:$0xff]
    %v835 = vld [vmem:[#allocation3 + $0x4b0] sm:$0xff]
    %v836 = vld [vmem:[#allocation3 + $0x4b8] sm:$0xff]
    %v837 = vld [vmem:[#allocation3 + $0x4c0] sm:$0xff]
    %v838 = vld [vmem:[#allocation3 + $0x4c8] sm:$0xff]
    %v839 = vld [vmem:[#allocation3 + $0x4d0] sm:$0xff]
    %v840 = vld [vmem:[#allocation3 + $0x4d8] sm:$0xff]
    %v841 = vld [vmem:[#allocation3 + $0x4e0] sm:$0xff]
    %v842 = vld [vmem:[#allocation3 + $0x4e8] sm:$0xff]
    %v843 = vld [vmem:[#allocation3 + $0x4f0] sm:$0xff]
    %v844 = vld [vmem:[#allocation3 + $0x4f8] sm:$0xff]
    %v845 = vld [vmem:[#allocation3 + $0x500] sm:$0xff]
    %v846 = vld [vmem:[#allocation3 + $0x508] sm:$0xff]
    %v847 = vld [vmem:[#allocation3 + $0x510] sm:$0xff]
    %v848 = vld [vmem:[#allocation3 + $0x518] sm:$0xff]
    %v849 = vld [vmem:[#allocation3 + $0x520] sm:$0xff]
    %v850 = vld [vmem:[#allocation3 + $0x528] sm:$0xff]
    %v851 = vld [vmem:[#allocation3 + $0x530] sm:$0xff]
    %v852 = vld [vmem:[#allocation3 + $0x538] sm:$0xff]
    %v853 = vld [vmem:[#allocation3 + $0x540] sm:$0xff]
    %v854 = vld [vmem:[#allocation3 + $0x548] sm:$0xff]
    %v855 = vld [vmem:[#allocation3 + $0x550] sm:$0xff]
    %v856 = vld [vmem:[#allocation3 + $0x558] sm:$0xff]
    %v857 = vld [vmem:[#allocation3 + $0x560] sm:$0xff]
    %v858 = vld [vmem:[#allocation3 + $0x568] sm:$0xff]
    %v859 = vld [vmem:[#allocation3 + $0x570] sm:$0xff]
    %v860 = vld [vmem:[#allocation3 + $0x578] sm:$0xff]
    %v861 = vld [vmem:[#allocation3 + $0x580] sm:$0xff]
    %v862 = vld [vmem:[#allocation3 + $0x588] sm:$0xff]
    %v863 = vld [vmem:[#allocation3 + $0x590] sm:$0xff]
    %v864 = vld [vmem:[#allocation3 + $0x598] sm:$0xff]
    %v865 = vld [vmem:[#allocation3 + $0x5a0] sm:$0xff]
    %v866 = vld [vmem:[#allocation3 + $0x5a8] sm:$0xff]
    %v867 = vld [vmem:[#allocation3 + $0x5b0] sm:$0xff]
    %v868 = vld [vmem:[#allocation3 + $0x5b8] sm:$0xff]
    %v869 = vld [vmem:[#allocation3 + $0x5c0] sm:$0xff]
    %v870 = vld [vmem:[#allocation3 + $0x5c8] sm:$0xff]
    %v871 = vld [vmem:[#allocation3 + $0x5d0] sm:$0xff]
    %v872 = vld [vmem:[#allocation3 + $0x5d8] sm:$0xff]
    %v873 = vld [vmem:[#allocation3 + $0x5e0] sm:$0xff]
    %v874 = vld [vmem:[#allocation3 + $0x5e8] sm:$0xff]
    %v875 = vld [vmem:[#allocation3 + $0x5f0] sm:$0xff]
    %v876 = vld [vmem:[#allocation3 + $0x5f8] sm:$0xff]
    %v877 = vld [vmem:[#allocation3 + $0x600] sm:$0xff]
    %v878 = vld [vmem:[#allocation3 + $0x608] sm:$0xff]
    %v879 = vld [vmem:[#allocation3 + $0x610] sm:$0xff]
    %v880 = vld [vmem:[#allocation3 + $0x618] sm:$0xff]
    %v881 = vld [vmem:[#allocation3 + $0x620] sm:$0xff]
    %v882 = vld [vmem:[#allocation3 + $0x628] sm:$0xff]
    %v883 = vld [vmem:[#allocation3 + $0x630] sm:$0xff]
    %v884 = vld [vmem:[#allocation3 + $0x638] sm:$0xff]
    %v885 = vld [vmem:[#allocation3 + $0x640] sm:$0xff]
    %v886 = vld [vmem:[#allocation3 + $0x648] sm:$0xff]
    %v887 = vld [vmem:[#allocation3 + $0x650] sm:$0xff]
    %v888 = vld [vmem:[#allocation3 + $0x658] sm:$0xff]
    %v889 = vld [vmem:[#allocation3 + $0x660] sm:$0xff]
    %v890 = vld [vmem:[#allocation3 + $0x668] sm:$0xff]
    %v891 = vld [vmem:[#allocation3 + $0x670] sm:$0xff]
    %v892 = vld [vmem:[#allocation3 + $0x678] sm:$0xff]
    %v893 = vld [vmem:[#allocation3 + $0x680] sm:$0xff]
    %v894 = vld [vmem:[#allocation3 + $0x688] sm:$0xff]
    %v895 = vld [vmem:[#allocation3 + $0x690] sm:$0xff]
    %v896 = vld [vmem:[#allocation3 + $0x698] sm:$0xff]
    %v897 = vld [vmem:[#allocation3 + $0x6a0] sm:$0xff]
    %v898 = vld [vmem:[#allocation3 + $0x6a8] sm:$0xff]
    %v899 = vld [vmem:[#allocation3 + $0x6b0] sm:$0xff]
    %v900 = vld [vmem:[#allocation3 + $0x6b8] sm:$0xff]
    %v901 = vld [vmem:[#allocation3 + $0x6c0] sm:$0xff]
    %v902 = vld [vmem:[#allocation3 + $0x6c8] sm:$0xff]
    %v903 = vld [vmem:[#allocation3 + $0x6d0] sm:$0xff]
    %v904 = vld [vmem:[#allocation3 + $0x6d8] sm:$0xff]
    %v905 = vld [vmem:[#allocation3 + $0x6e0] sm:$0xff]
    %v906 = vld [vmem:[#allocation3 + $0x6e8] sm:$0xff]
    %v907 = vld [vmem:[#allocation3 + $0x6f0] sm:$0xff]
    %v908 = vld [vmem:[#allocation3 + $0x6f8] sm:$0xff]
    %v909 = vld [vmem:[#allocation3 + $0x700] sm:$0xff]
    %v910 = vld [vmem:[#allocation3 + $0x708] sm:$0xff]
    %v911 = vld [vmem:[#allocation3 + $0x710] sm:$0xff]
    %v912 = vld [vmem:[#allocation3 + $0x718] sm:$0xff]
    %v913 = vld [vmem:[#allocation3 + $0x720] sm:$0xff]
    %v914 = vld [vmem:[#allocation3 + $0x728] sm:$0xff]
    %v915 = vld [vmem:[#allocation3 + $0x730] sm:$0xff]
    %v916 = vld [vmem:[#allocation3 + $0x738] sm:$0xff]
    %v917 = vld [vmem:[#allocation3 + $0x740] sm:$0xff]
    %v918 = vld [vmem:[#allocation3 + $0x748] sm:$0xff]
    %v919 = vld [vmem:[#allocation3 + $0x750] sm:$0xff]
    %v920 = vld [vmem:[#allocation3 + $0x758] sm:$0xff]
    %v921 = vld [vmem:[#allocation3 + $0x760] sm:$0xff]
    %v922 = vld [vmem:[#allocation3 + $0x768] sm:$0xff]
    %v923 = vld [vmem:[#allocation3 + $0x770] sm:$0xff]
    %v924 = vld [vmem:[#allocation3 + $0x778] sm:$0xff]
    %v925 = vld [vmem:[#allocation3 + $0x780] sm:$0xff]
    %v926 = vld [vmem:[#allocation3 + $0x788] sm:$0xff]
    %v927 = vld [vmem:[#allocation3 + $0x790] sm:$0xff]
    %v928 = vld [vmem:[#allocation3 + $0x798] sm:$0xff]
    %v929 = vld [vmem:[#allocation3 + $0x7a0] sm:$0xff]
    %v930 = vld [vmem:[#allocation3 + $0x7a8] sm:$0xff]
    %v931 = vld [vmem:[#allocation3 + $0x7b0] sm:$0xff]
    %v932 = vld [vmem:[#allocation3 + $0x7b8] sm:$0xff]
    %v933 = vld [vmem:[#allocation3 + $0x7c0] sm:$0xff]
    %v934 = vld [vmem:[#allocation3 + $0x7c8] sm:$0xff]
    %v935 = vld [vmem:[#allocation3 + $0x7d0] sm:$0xff]
    %v936 = vld [vmem:[#allocation3 + $0x7d8] sm:$0xff]
    %v937 = vld [vmem:[#allocation3 + $0x7e0] sm:$0xff]
    %v938 = vld [vmem:[#allocation3 + $0x7e8] sm:$0xff]
    %v939 = vld [vmem:[#allocation3 + $0x7f0] sm:$0xff]
    %v940 = vld [vmem:[#allocation3 + $0x7f8] sm:$0xff]
    %v941 = vld [vmem:[%s13] sm:$0xff]
    %v943 = vlaneseq
    %v944 = vshrl.u32 %v943, 7
    %v945 = vsub.s32 0, %v944
    %v946 = vrot.slane %v941, %v945
    %v947 = vlaneseq
    %v948 = vshrl.u32 %v947, 7
    %v949 = vsub.s32 1, %v948
    %v950 = vrot.slane %v941, %v949
    %v951 = vlaneseq
    %v952 = vshrl.u32 %v951, 7
    %v953 = vsub.s32 2, %v952
    %v954 = vrot.slane %v941, %v953
    %v955 = vlaneseq
    %v956 = vshrl.u32 %v955, 7
    %v957 = vsub.s32 3, %v956
    %v958 = vrot.slane %v941, %v957
    %v959 = vlaneseq
    %v960 = vshrl.u32 %v959, 7
    %v961 = vsub.s32 4, %v960
    %v962 = vrot.slane %v941, %v961
    %v963 = vlaneseq
    %v964 = vshrl.u32 %v963, 7
    %v965 = vsub.s32 5, %v964
    %v966 = vrot.slane %v941, %v965
    %v967 = vlaneseq
    %v968 = vshrl.u32 %v967, 7
    %v969 = vsub.s32 6, %v968
    %v970 = vrot.slane %v941, %v969
    %v971 = vlaneseq
    %v972 = vshrl.u32 %v971, 7
    %v973 = vsub.s32 7, %v972
    %v974 = vrot.slane %v941, %v973
    %983 = vmatprep.subr.mxu0 %v686
    %984 = vmatpush1.msra.mxu0 %v685
    %985 = vmatprep.subr.mxu0 %v694
    %986 = vmatpush1.msra.mxu0 %v693
    %987 = vmatprep.subr.mxu0 %v702
    %988 = vmatpush1.msra.mxu0 %v701
    %989 = vmatprep.subr.mxu0 %v710
    %990 = vmatpush1.msra.mxu0 %v709
    %991 = vmatprep.subr.mxu0 %v718
    %992 = vmatpush1.msra.mxu0 %v717
    %993 = vmatprep.subr.mxu0 %v726
    %994 = vmatpush1.msra.mxu0 %v725
    %995 = vmatprep.subr.mxu0 %v734
    %996 = vmatpush1.msra.mxu0 %v733
    %997 = vmatprep.subr.mxu0 %v742
    %998 = vmatpush1.msra.mxu0 %v741
    %999 = vmatprep.subr.mxu0 %v750
    %1000 = vmatpush1.msra.mxu0 %v749
    %1001 = vmatprep.subr.mxu0 %v758
    %1002 = vmatpush1.msra.mxu0 %v757
    %1003 = vmatprep.subr.mxu0 %v766
    %1004 = vmatpush1.msra.mxu0 %v765
    %1005 = vmatprep.subr.mxu0 %v774
    %1006 = vmatpush1.msra.mxu0 %v773
    %1007 = vmatprep.subr.mxu0 %v782
    %1008 = vmatpush1.msra.mxu0 %v781
    %1009 = vmatprep.subr.mxu0 %v790
    %1010 = vmatpush1.msra.mxu0 %v789
    %1011 = vmatprep.subr.mxu0 %v798
    %1012 = vmatpush1.msra.mxu0 %v797
    %1013 = vmatprep.subr.mxu0 %v806
    %1014 = vmatpush1.msra.mxu0 %v805
    %1015 = vmatprep.subr.mxu0 %v814
    %1016 = vmatpush1.msra.mxu0 %v813
    %1017 = vmatprep.subr.mxu0 %v822
    %1018 = vmatpush1.msra.mxu0 %v821
    %1019 = vmatprep.subr.mxu0 %v830
    %1020 = vmatpush1.msra.mxu0 %v829
    %1021 = vmatprep.subr.mxu0 %v838
    %1022 = vmatpush1.msra.mxu0 %v837
    %1023 = vmatprep.subr.mxu0 %v846
    %1024 = vmatpush1.msra.mxu0 %v845
    %1025 = vmatprep.subr.mxu0 %v854
    %1026 = vmatpush1.msra.mxu0 %v853
    %1027 = vmatprep.subr.mxu0 %v862
    %1028 = vmatpush1.msra.mxu0 %v861
    %1029 = vmatprep.subr.mxu0 %v870
    %1030 = vmatpush1.msra.mxu0 %v869
    %1031 = vmatprep.subr.mxu0 %v878
    %1032 = vmatpush1.msra.mxu0 %v877
    %1033 = vmatprep.subr.mxu0 %v886
    %1034 = vmatpush1.msra.mxu0 %v885
    %1035 = vmatprep.subr.mxu0 %v894
    %1036 = vmatpush1.msra.mxu0 %v893
    %1037 = vmatprep.subr.mxu0 %v902
    %1038 = vmatpush1.msra.mxu0 %v901
    %1039 = vmatprep.subr.mxu0 %v910
    %1040 = vmatpush1.msra.mxu0 %v909
    %1041 = vmatprep.subr.mxu0 %v918
    %1042 = vmatpush1.msra.mxu0 %v917
    %1043 = vmatprep.subr.mxu0 %v926
    %1044 = vmatpush1.msra.mxu0 %v925
    %1045 = vmatprep.subr.mxu0 %v934
    %1046 = vmatpush1.msra.mxu0 %v933
    %1047 = vmatprep.mubr.f32.mxu0 %v682
    %1048 = vmatmul.mubr.f32.gmra.mrb[0].mxu0 %v681
    %v1049 = vpop.f32.mrb[0].mxu0
    %v1050 = vadd.f32 %v946, %v1049
    %v1051 = vpop.f32.mrb[0].mxu0
    %v1052 = vadd.f32 %v950, %v1051
    %1053 = vmatprep.mubr.f32.mxu0 %v684
    %1054 = vmatmul.mubr.f32.gmra.mrb[0].mxu0 %v683
    %v1055 = vpop.f32.mrb[0].mxu0
    %v1056 = vadd.f32 %v946, %v1055
    %v1057 = vpop.f32.mrb[0].mxu0
    %v1058 = vadd.f32 %v950, %v1057
    %1059 = vdwg.mxu0
    %1060 = vmatprep.subr.mxu0 %v688
    %1061 = vmatpush1.msra.mxu0 %v687
    %1062 = vmatprep.subr.mxu0 %v696
    %1063 = vmatpush1.msra.mxu0 %v695
    %1064 = vmatprep.subr.mxu0 %v704
    %1065 = vmatpush1.msra.mxu0 %v703
    %1066 = vmatprep.subr.mxu0 %v712
    %1067 = vmatpush1.msra.mxu0 %v711
    %1068 = vmatprep.subr.mxu0 %v720
    %1069 = vmatpush1.msra.mxu0 %v719
    %1070 = vmatprep.subr.mxu0 %v728
    %1071 = vmatpush1.msra.mxu0 %v727
    %1072 = vmatprep.subr.mxu0 %v736
    %1073 = vmatpush1.msra.mxu0 %v735
    %1074 = vmatprep.subr.mxu0 %v744
    %1075 = vmatpush1.msra.mxu0 %v743
    %1076 = vmatprep.subr.mxu0 %v752
    %1077 = vmatpush1.msra.mxu0 %v751
    %1078 = vmatprep.subr.mxu0 %v760
    %1079 = vmatpush1.msra.mxu0 %v759
    %1080 = vmatprep.subr.mxu0 %v768
    %1081 = vmatpush1.msra.mxu0 %v767
    %1082 = vmatprep.subr.mxu0 %v776
    %1083 = vmatpush1.msra.mxu0 %v775
    %1084 = vmatprep.subr.mxu0 %v784
    %1085 = vmatpush1.msra.mxu0 %v783
    %1086 = vmatprep.subr.mxu0 %v792
    %1087 = vmatpush1.msra.mxu0 %v791
    %1088 = vmatprep.subr.mxu0 %v800
    %1089 = vmatpush1.msra.mxu0 %v799
    %1090 = vmatprep.subr.mxu0 %v808
    %1091 = vmatpush1.msra.mxu0 %v807
    %1092 = vmatprep.subr.mxu0 %v816
    %1093 = vmatpush1.msra.mxu0 %v815
    %1094 = vmatprep.subr.mxu0 %v824
    %1095 = vmatpush1.msra.mxu0 %v823
    %1096 = vmatprep.subr.mxu0 %v832
    %1097 = vmatpush1.msra.mxu0 %v831
    %1098 = vmatprep.subr.mxu0 %v840
    %1099 = vmatpush1.msra.mxu0 %v839
    %1100 = vmatprep.subr.mxu0 %v848
    %1101 = vmatpush1.msra.mxu0 %v847
    %1102 = vmatprep.subr.mxu0 %v856
    %1103 = vmatpush1.msra.mxu0 %v855
    %1104 = vmatprep.subr.mxu0 %v864
    %1105 = vmatpush1.msra.mxu0 %v863
    %1106 = vmatprep.subr.mxu0 %v872
    %1107 = vmatpush1.msra.mxu0 %v871
    %1108 = vmatprep.subr.mxu0 %v880
    %1109 = vmatpush1.msra.mxu0 %v879
    %1110 = vmatprep.subr.mxu0 %v888
    %1111 = vmatpush1.msra.mxu0 %v887
    %1112 = vmatprep.subr.mxu0 %v896
    %1113 = vmatpush1.msra.mxu0 %v895
    %1114 = vmatprep.subr.mxu0 %v904
    %1115 = vmatpush1.msra.mxu0 %v903
    %1116 = vmatprep.subr.mxu0 %v912
    %1117 = vmatpush1.msra.mxu0 %v911
    %1118 = vmatprep.subr.mxu0 %v920
    %1119 = vmatpush1.msra.mxu0 %v919
    %1120 = vmatprep.subr.mxu0 %v928
    %1121 = vmatpush1.msra.mxu0 %v927
    %1122 = vmatprep.subr.mxu0 %v936
    %1123 = vmatpush1.msra.mxu0 %v935
    %1124 = vmatprep.mubr.f32.mxu0 %v682
    %1125 = vmatmul.mubr.f32.gmra.mrb[0].mxu0 %v681
    %v1126 = vpop.f32.mrb[0].mxu0
    %v1127 = vadd.f32 %v954, %v1126
    %v1128 = vpop.f32.mrb[0].mxu0
    %v1129 = vadd.f32 %v958, %v1128
    %1130 = vmatprep.mubr.f32.mxu0 %v684
    %1131 = vmatmul.mubr.f32.gmra.mrb[0].mxu0 %v683
    %v1132 = vpop.f32.mrb[0].mxu0
    %v1133 = vadd.f32 %v954, %v1132
    %v1134 = vpop.f32.mrb[0].mxu0
    %v1135 = vadd.f32 %v958, %v1134
    %1136 = vdwg.mxu0
    %1137 = vmatprep.subr.mxu0 %v690
    %1138 = vmatpush1.msra.mxu0 %v689
    %1139 = vmatprep.subr.mxu0 %v698
    %1140 = vmatpush1.msra.mxu0 %v697
    %1141 = vmatprep.subr.mxu0 %v706
    %1142 = vmatpush1.msra.mxu0 %v705
    %1143 = vmatprep.subr.mxu0 %v714
    %1144 = vmatpush1.msra.mxu0 %v713
    %1145 = vmatprep.subr.mxu0 %v722
    %1146 = vmatpush1.msra.mxu0 %v721
    %1147 = vmatprep.subr.mxu0 %v730
    %1148 = vmatpush1.msra.mxu0 %v729
    %1149 = vmatprep.subr.mxu0 %v738
    %1150 = vmatpush1.msra.mxu0 %v737
    %1151 = vmatprep.subr.mxu0 %v746
    %1152 = vmatpush1.msra.mxu0 %v745
    %1153 = vmatprep.subr.mxu0 %v754
    %1154 = vmatpush1.msra.mxu0 %v753
    %1155 = vmatprep.subr.mxu0 %v762
    %1156 = vmatpush1.msra.mxu0 %v761
    %1157 = vmatprep.subr.mxu0 %v770
    %1158 = vmatpush1.msra.mxu0 %v769
    %1159 = vmatprep.subr.mxu0 %v778
    %1160 = vmatpush1.msra.mxu0 %v777
    %1161 = vmatprep.subr.mxu0 %v786
    %1162 = vmatpush1.msra.mxu0 %v785
    %1163 = vmatprep.subr.mxu0 %v794
    %1164 = vmatpush1.msra.mxu0 %v793
    %1165 = vmatprep.subr.mxu0 %v802
    %1166 = vmatpush1.msra.mxu0 %v801
    %1167 = vmatprep.subr.mxu0 %v810
    %1168 = vmatpush1.msra.mxu0 %v809
    %1169 = vmatprep.subr.mxu0 %v818
    %1170 = vmatpush1.msra.mxu0 %v817
    %1171 = vmatprep.subr.mxu0 %v826
    %1172 = vmatpush1.msra.mxu0 %v825
    %1173 = vmatprep.subr.mxu0 %v834
    %1174 = vmatpush1.msra.mxu0 %v833
    %1175 = vmatprep.subr.mxu0 %v842
    %1176 = vmatpush1.msra.mxu0 %v841
    %1177 = vmatprep.subr.mxu0 %v850
    %1178 = vmatpush1.msra.mxu0 %v849
    %1179 = vmatprep.subr.mxu0 %v858
    %1180 = vmatpush1.msra.mxu0 %v857
    %1181 = vmatprep.subr.mxu0 %v866
    %1182 = vmatpush1.msra.mxu0 %v865
    %1183 = vmatprep.subr.mxu0 %v874
    %1184 = vmatpush1.msra.mxu0 %v873
    %1185 = vmatprep.subr.mxu0 %v882
    %1186 = vmatpush1.msra.mxu0 %v881
    %1187 = vmatprep.subr.mxu0 %v890
    %1188 = vmatpush1.msra.mxu0 %v889
    %1189 = vmatprep.subr.mxu0 %v898
    %1190 = vmatpush1.msra.mxu0 %v897
    %1191 = vmatprep.subr.mxu0 %v906
    %1192 = vmatpush1.msra.mxu0 %v905
    %1193 = vmatprep.subr.mxu0 %v914
    %1194 = vmatpush1.msra.mxu0 %v913
    %1195 = vmatprep.subr.mxu0 %v922
    %1196 = vmatpush1.msra.mxu0 %v921
    %1197 = vmatprep.subr.mxu0 %v930
    %1198 = vmatpush1.msra.mxu0 %v929
    %1199 = vmatprep.subr.mxu0 %v938
    %1200 = vmatpush1.msra.mxu0 %v937
    %1201 = vmatprep.mubr.f32.mxu0 %v682
    %1202 = vmatmul.mubr.f32.gmra.mrb[0].mxu0 %v681
    %v1203 = vpop.f32.mrb[0].mxu0
    %v1204 = vadd.f32 %v962, %v1203
    %v1205 = vpop.f32.mrb[0].mxu0
    %v1206 = vadd.f32 %v966, %v1205
    %1207 = vmatprep.mubr.f32.mxu0 %v684
    %1208 = vmatmul.mubr.f32.gmra.mrb[0].mxu0 %v683
    %v1209 = vpop.f32.mrb[0].mxu0
    %v1210 = vadd.f32 %v962, %v1209
    %v1211 = vpop.f32.mrb[0].mxu0
    %v1212 = vadd.f32 %v966, %v1211
    %1213 = vdwg.mxu0
    %1214 = vmatprep.subr.mxu0 %v692
    %1215 = vmatpush1.msra.mxu0 %v691
    %1216 = vmatprep.subr.mxu0 %v700
    %1217 = vmatpush1.msra.mxu0 %v699
    %1218 = vmatprep.subr.mxu0 %v708
    %1219 = vmatpush1.msra.mxu0 %v707
    %1220 = vmatprep.subr.mxu0 %v716
    %1221 = vmatpush1.msra.mxu0 %v715
    %1222 = vmatprep.subr.mxu0 %v724
    %1223 = vmatpush1.msra.mxu0 %v723
    %1224 = vmatprep.subr.mxu0 %v732
    %1225 = vmatpush1.msra.mxu0 %v731
    %1226 = vmatprep.subr.mxu0 %v740
    %1227 = vmatpush1.msra.mxu0 %v739
    %1228 = vmatprep.subr.mxu0 %v748
    %1229 = vmatpush1.msra.mxu0 %v747
    %1230 = vmatprep.subr.mxu0 %v756
    %1231 = vmatpush1.msra.mxu0 %v755
    %1232 = vmatprep.subr.mxu0 %v764
    %1233 = vmatpush1.msra.mxu0 %v763
    %1234 = vmatprep.subr.mxu0 %v772
    %1235 = vmatpush1.msra.mxu0 %v771
    %1236 = vmatprep.subr.mxu0 %v780
    %1237 = vmatpush1.msra.mxu0 %v779
    %1238 = vmatprep.subr.mxu0 %v788
    %1239 = vmatpush1.msra.mxu0 %v787
    %1240 = vmatprep.subr.mxu0 %v796
    %1241 = vmatpush1.msra.mxu0 %v795
    %1242 = vmatprep.subr.mxu0 %v804
    %1243 = vmatpush1.msra.mxu0 %v803
    %1244 = vmatprep.subr.mxu0 %v812
    %1245 = vmatpush1.msra.mxu0 %v811
    %1246 = vmatprep.subr.mxu0 %v820
    %1247 = vmatpush1.msra.mxu0 %v819
    %1248 = vmatprep.subr.mxu0 %v828
    %1249 = vmatpush1.msra.mxu0 %v827
    %1250 = vmatprep.subr.mxu0 %v836
    %1251 = vmatpush1.msra.mxu0 %v835
    %1252 = vmatprep.subr.mxu0 %v844
    %1253 = vmatpush1.msra.mxu0 %v843
    %1254 = vmatprep.subr.mxu0 %v852
    %1255 = vmatpush1.msra.mxu0 %v851
    %1256 = vmatprep.subr.mxu0 %v860
    %1257 = vmatpush1.msra.mxu0 %v859
    %1258 = vmatprep.subr.mxu0 %v868
    %1259 = vmatpush1.msra.mxu0 %v867
    %1260 = vmatprep.subr.mxu0 %v876
    %1261 = vmatpush1.msra.mxu0 %v875
    %1262 = vmatprep.subr.mxu0 %v884
    %1263 = vmatpush1.msra.mxu0 %v883
    %1264 = vmatprep.subr.mxu0 %v892
    %1265 = vmatpush1.msra.mxu0 %v891
    %1266 = vmatprep.subr.mxu0 %v900
    %1267 = vmatpush1.msra.mxu0 %v899
    %1268 = vmatprep.subr.mxu0 %v908
    %1269 = vmatpush1.msra.mxu0 %v907
    %1270 = vmatprep.subr.mxu0 %v916
    %1271 = vmatpush1.msra.mxu0 %v915
    %1272 = vmatprep.subr.mxu0 %v924
    %1273 = vmatpush1.msra.mxu0 %v923
    %1274 = vmatprep.subr.mxu0 %v932
    %1275 = vmatpush1.msra.mxu0 %v931
    %1276 = vmatprep.subr.mxu0 %v940
    %1277 = vmatpush1.msra.mxu0 %v939
    %1278 = vmatprep.mubr.f32.mxu0 %v682
    %1279 = vmatmul.mubr.f32.gmra.mrb[0].mxu0 %v681
    %v1280 = vpop.f32.mrb[0].mxu0
    %v1281 = vadd.f32 %v970, %v1280
    %v1282 = vpop.f32.mrb[0].mxu0
    %v1283 = vadd.f32 %v974, %v1282
    %1284 = vmatprep.mubr.f32.mxu0 %v684
    %1285 = vmatmul.mubr.f32.gmra.mrb[0].mxu0 %v683
    %v1286 = vpop.f32.mrb[0].mxu0
    %v1287 = vadd.f32 %v970, %v1286
    %v1288 = vpop.f32.mrb[0].mxu0
    %v1289 = vadd.f32 %v974, %v1288
    %1290 = vdwg.mxu0
    %v1291 = vmax.f32 %v1050, 0.0
    %v1292 = vmax.f32 %v1052, 0.0
    %v1293 = vmax.f32 %v1127, 0.0
    %v1294 = vmax.f32 %v1129, 0.0
    %v1295 = vmax.f32 %v1204, 0.0
    %v1296 = vmax.f32 %v1206, 0.0
    %v1297 = vmax.f32 %v1281, 0.0
    %v1298 = vmax.f32 %v1283, 0.0
    %v1299 = vmax.f32 %v1056, 0.0
    %v1300 = vmax.f32 %v1058, 0.0
    %v1301 = vmax.f32 %v1133, 0.0
    %v1302 = vmax.f32 %v1135, 0.0
    %v1303 = vmax.f32 %v1210, 0.0
    %v1304 = vmax.f32 %v1212, 0.0
    %v1305 = vmax.f32 %v1287, 0.0
    %v1306 = vmax.f32 %v1289, 0.0
    %v1307 = vld [vmem:[%s14] sm:$0xff]
    %v1308 = vld [vmem:[%s14 + $0x8] sm:$0xff]
    %v1309 = vld [vmem:[%s14 + $0x10] sm:$0xff]
    %v1310 = vld [vmem:[%s14 + $0x18] sm:$0xff]
    %v1311 = vld [vmem:[%s14 + $0x20] sm:$0xff]
    %v1312 = vld [vmem:[%s14 + $0x28] sm:$0xff]
    %v1313 = vld [vmem:[%s14 + $0x30] sm:$0xff]
    %v1314 = vld [vmem:[%s14 + $0x38] sm:$0xff]
    %v1315 = vld [vmem:[%s14 + $0x40] sm:$0xff]
    %v1316 = vld [vmem:[%s14 + $0x48] sm:$0xff]
    %v1317 = vld [vmem:[%s14 + $0x50] sm:$0xff]
    %v1318 = vld [vmem:[%s14 + $0x58] sm:$0xff]
    %v1319 = vld [vmem:[%s14 + $0x60] sm:$0xff]
    %v1320 = vld [vmem:[%s14 + $0x68] sm:$0xff]
    %v1321 = vld [vmem:[%s14 + $0x70] sm:$0xff]
    %v1322 = vld [vmem:[%s14 + $0x78] sm:$0xff]
    %v1323 = vld [vmem:[%s14 + $0x80] sm:$0xff]
    %v1324 = vld [vmem:[%s14 + $0x88] sm:$0xff]
    %v1325 = vld [vmem:[%s14 + $0x90] sm:$0xff]
    %v1326 = vld [vmem:[%s14 + $0x98] sm:$0xff]
    %v1327 = vld [vmem:[%s14 + $0xa0] sm:$0xff]
    %v1328 = vld [vmem:[%s14 + $0xa8] sm:$0xff]
    %v1329 = vld [vmem:[%s14 + $0xb0] sm:$0xff]
    %v1330 = vld [vmem:[%s14 + $0xb8] sm:$0xff]
    %v1331 = vld [vmem:[%s14 + $0xc0] sm:$0xff]
    %v1332 = vld [vmem:[%s14 + $0xc8] sm:$0xff]
    %v1333 = vld [vmem:[%s14 + $0xd0] sm:$0xff]
    %v1334 = vld [vmem:[%s14 + $0xd8] sm:$0xff]
    %v1335 = vld [vmem:[%s14 + $0xe0] sm:$0xff]
    %v1336 = vld [vmem:[%s14 + $0xe8] sm:$0xff]
    %v1337 = vld [vmem:[%s14 + $0xf0] sm:$0xff]
    %v1338 = vld [vmem:[%s14 + $0xf8] sm:$0xff]
    %v1339 = vld [vmem:[%s14 + $0x100] sm:$0xff]
    %v1340 = vld [vmem:[%s14 + $0x108] sm:$0xff]
    %v1341 = vld [vmem:[%s14 + $0x110] sm:$0xff]
    %v1342 = vld [vmem:[%s14 + $0x118] sm:$0xff]
    %v1343 = vld [vmem:[%s14 + $0x120] sm:$0xff]
    %v1344 = vld [vmem:[%s14 + $0x128] sm:$0xff]
    %v1345 = vld [vmem:[%s14 + $0x130] sm:$0xff]
    %v1346 = vld [vmem:[%s14 + $0x138] sm:$0xff]
    %v1347 = vld [vmem:[%s14 + $0x140] sm:$0xff]
    %v1348 = vld [vmem:[%s14 + $0x148] sm:$0xff]
    %v1349 = vld [vmem:[%s14 + $0x150] sm:$0xff]
    %v1350 = vld [vmem:[%s14 + $0x158] sm:$0xff]
    %v1351 = vld [vmem:[%s14 + $0x160] sm:$0xff]
    %v1352 = vld [vmem:[%s14 + $0x168] sm:$0xff]
    %v1353 = vld [vmem:[%s14 + $0x170] sm:$0xff]
    %v1354 = vld [vmem:[%s14 + $0x178] sm:$0xff]
    %v1355 = vld [vmem:[%s14 + $0x180] sm:$0xff]
    %v1356 = vld [vmem:[%s14 + $0x188] sm:$0xff]
    %v1357 = vld [vmem:[%s14 + $0x190] sm:$0xff]
    %v1358 = vld [vmem:[%s14 + $0x198] sm:$0xff]
    %v1359 = vld [vmem:[%s14 + $0x1a0] sm:$0xff]
    %v1360 = vld [vmem:[%s14 + $0x1a8] sm:$0xff]
    %v1361 = vld [vmem:[%s14 + $0x1b0] sm:$0xff]
    %v1362 = vld [vmem:[%s14 + $0x1b8] sm:$0xff]
    %v1363 = vld [vmem:[%s14 + $0x1c0] sm:$0xff]
    %v1364 = vld [vmem:[%s14 + $0x1c8] sm:$0xff]
    %v1365 = vld [vmem:[%s14 + $0x1d0] sm:$0xff]
    %v1366 = vld [vmem:[%s14 + $0x1d8] sm:$0xff]
    %v1367 = vld [vmem:[%s14 + $0x1e0] sm:$0xff]
    %v1368 = vld [vmem:[%s14 + $0x1e8] sm:$0xff]
    %v1369 = vld [vmem:[%s14 + $0x1f0] sm:$0xff]
    %v1370 = vld [vmem:[%s14 + $0x1f8] sm:$0xff]
    %v1371 = vld [vmem:[%s14 + $0x200] sm:$0xff]
    %v1372 = vld [vmem:[%s14 + $0x208] sm:$0xff]
    %v1373 = vld [vmem:[%s14 + $0x210] sm:$0xff]
    %v1374 = vld [vmem:[%s14 + $0x218] sm:$0xff]
    %v1375 = vld [vmem:[%s14 + $0x220] sm:$0xff]
    %v1376 = vld [vmem:[%s14 + $0x228] sm:$0xff]
    %v1377 = vld [vmem:[%s14 + $0x230] sm:$0xff]
    %v1378 = vld [vmem:[%s14 + $0x238] sm:$0xff]
    %v1379 = vld [vmem:[%s14 + $0x240] sm:$0xff]
    %v1380 = vld [vmem:[%s14 + $0x248] sm:$0xff]
    %v1381 = vld [vmem:[%s14 + $0x250] sm:$0xff]
    %v1382 = vld [vmem:[%s14 + $0x258] sm:$0xff]
    %v1383 = vld [vmem:[%s14 + $0x260] sm:$0xff]
    %v1384 = vld [vmem:[%s14 + $0x268] sm:$0xff]
    %v1385 = vld [vmem:[%s14 + $0x270] sm:$0xff]
    %v1386 = vld [vmem:[%s14 + $0x278] sm:$0xff]
    %v1387 = vld [vmem:[%s14 + $0x280] sm:$0xff]
    %v1388 = vld [vmem:[%s14 + $0x288] sm:$0xff]
    %v1389 = vld [vmem:[%s14 + $0x290] sm:$0xff]
    %v1390 = vld [vmem:[%s14 + $0x298] sm:$0xff]
    %v1391 = vld [vmem:[%s14 + $0x2a0] sm:$0xff]
    %v1392 = vld [vmem:[%s14 + $0x2a8] sm:$0xff]
    %v1393 = vld [vmem:[%s14 + $0x2b0] sm:$0xff]
    %v1394 = vld [vmem:[%s14 + $0x2b8] sm:$0xff]
    %v1395 = vld [vmem:[%s14 + $0x2c0] sm:$0xff]
    %v1396 = vld [vmem:[%s14 + $0x2c8] sm:$0xff]
    %v1397 = vld [vmem:[%s14 + $0x2d0] sm:$0xff]
    %v1398 = vld [vmem:[%s14 + $0x2d8] sm:$0xff]
    %v1399 = vld [vmem:[%s14 + $0x2e0] sm:$0xff]
    %v1400 = vld [vmem:[%s14 + $0x2e8] sm:$0xff]
    %v1401 = vld [vmem:[%s14 + $0x2f0] sm:$0xff]
    %v1402 = vld [vmem:[%s14 + $0x2f8] sm:$0xff]
    %v1403 = vld [vmem:[%s14 + $0x300] sm:$0xff]
    %v1404 = vld [vmem:[%s14 + $0x308] sm:$0xff]
    %v1405 = vld [vmem:[%s14 + $0x310] sm:$0xff]
    %v1406 = vld [vmem:[%s14 + $0x318] sm:$0xff]
    %v1407 = vld [vmem:[%s14 + $0x320] sm:$0xff]
    %v1408 = vld [vmem:[%s14 + $0x328] sm:$0xff]
    %v1409 = vld [vmem:[%s14 + $0x330] sm:$0xff]
    %v1410 = vld [vmem:[%s14 + $0x338] sm:$0xff]
    %v1411 = vld [vmem:[%s14 + $0x340] sm:$0xff]
    %v1412 = vld [vmem:[%s14 + $0x348] sm:$0xff]
    %v1413 = vld [vmem:[%s14 + $0x350] sm:$0xff]
    %v1414 = vld [vmem:[%s14 + $0x358] sm:$0xff]
    %v1415 = vld [vmem:[%s14 + $0x360] sm:$0xff]
    %v1416 = vld [vmem:[%s14 + $0x368] sm:$0xff]
    %v1417 = vld [vmem:[%s14 + $0x370] sm:$0xff]
    %v1418 = vld [vmem:[%s14 + $0x378] sm:$0xff]
    %v1419 = vld [vmem:[%s14 + $0x380] sm:$0xff]
    %v1420 = vld [vmem:[%s14 + $0x388] sm:$0xff]
    %v1421 = vld [vmem:[%s14 + $0x390] sm:$0xff]
    %v1422 = vld [vmem:[%s14 + $0x398] sm:$0xff]
    %v1423 = vld [vmem:[%s14 + $0x3a0] sm:$0xff]
    %v1424 = vld [vmem:[%s14 + $0x3a8] sm:$0xff]
    %v1425 = vld [vmem:[%s14 + $0x3b0] sm:$0xff]
    %v1426 = vld [vmem:[%s14 + $0x3b8] sm:$0xff]
    %v1427 = vld [vmem:[%s14 + $0x3c0] sm:$0xff]
    %v1428 = vld [vmem:[%s14 + $0x3c8] sm:$0xff]
    %v1429 = vld [vmem:[%s14 + $0x3d0] sm:$0xff]
    %v1430 = vld [vmem:[%s14 + $0x3d8] sm:$0xff]
    %v1431 = vld [vmem:[%s14 + $0x3e0] sm:$0xff]
    %v1432 = vld [vmem:[%s14 + $0x3e8] sm:$0xff]
    %v1433 = vld [vmem:[%s14 + $0x3f0] sm:$0xff]
    %v1434 = vld [vmem:[%s14 + $0x3f8] sm:$0xff]
    %v1435 = vld [vmem:[%s15] sm:$0x1]
    %v1437 = vlaneseq
    %v1438 = vshrl.u32 %v1437, 7
    %v1439 = vsub.s32 0, %v1438
    %v1440 = vrot.slane %v1435, %v1439
    %1442 = vmatprep.subr.mxu0 0.0
    %1443 = vmatpush1.msra.mxu0 %v1307
    %1444 = vmatprep.subr.mxu0 0.0
    %1445 = vmatpush1.msra.mxu0 %v1308
    %1446 = vmatprep.subr.mxu0 0.0
    %1447 = vmatpush1.msra.mxu0 %v1309
    %1448 = vmatprep.subr.mxu0 0.0
    %1449 = vmatpush1.msra.mxu0 %v1310
    %1450 = vmatprep.subr.mxu0 0.0
    %1451 = vmatpush1.msra.mxu0 %v1311
    %1452 = vmatprep.subr.mxu0 0.0
    %1453 = vmatpush1.msra.mxu0 %v1312
    %1454 = vmatprep.subr.mxu0 0.0
    %1455 = vmatpush1.msra.mxu0 %v1313
    %1456 = vmatprep.subr.mxu0 0.0
    %1457 = vmatpush1.msra.mxu0 %v1314
    %1458 = vmatprep.subr.mxu0 0.0
    %1459 = vmatpush1.msra.mxu0 %v1315
    %1460 = vmatprep.subr.mxu0 0.0
    %1461 = vmatpush1.msra.mxu0 %v1316
    %1462 = vmatprep.subr.mxu0 0.0
    %1463 = vmatpush1.msra.mxu0 %v1317
    %1464 = vmatprep.subr.mxu0 0.0
    %1465 = vmatpush1.msra.mxu0 %v1318
    %1466 = vmatprep.subr.mxu0 0.0
    %1467 = vmatpush1.msra.mxu0 %v1319
    %1468 = vmatprep.subr.mxu0 0.0
    %1469 = vmatpush1.msra.mxu0 %v1320
    %1470 = vmatprep.subr.mxu0 0.0
    %1471 = vmatpush1.msra.mxu0 %v1321
    %1472 = vmatprep.subr.mxu0 0.0
    %1473 = vmatpush1.msra.mxu0 %v1322
    %1474 = vmatprep.subr.mxu0 0.0
    %1475 = vmatpush1.msra.mxu0 %v1323
    %1476 = vmatprep.subr.mxu0 0.0
    %1477 = vmatpush1.msra.mxu0 %v1324
    %1478 = vmatprep.subr.mxu0 0.0
    %1479 = vmatpush1.msra.mxu0 %v1325
    %1480 = vmatprep.subr.mxu0 0.0
    %1481 = vmatpush1.msra.mxu0 %v1326
    %1482 = vmatprep.subr.mxu0 0.0
    %1483 = vmatpush1.msra.mxu0 %v1327
    %1484 = vmatprep.subr.mxu0 0.0
    %1485 = vmatpush1.msra.mxu0 %v1328
    %1486 = vmatprep.subr.mxu0 0.0
    %1487 = vmatpush1.msra.mxu0 %v1329
    %1488 = vmatprep.subr.mxu0 0.0
    %1489 = vmatpush1.msra.mxu0 %v1330
    %1490 = vmatprep.subr.mxu0 0.0
    %1491 = vmatpush1.msra.mxu0 %v1331
    %1492 = vmatprep.subr.mxu0 0.0
    %1493 = vmatpush1.msra.mxu0 %v1332
    %1494 = vmatprep.subr.mxu0 0.0
    %1495 = vmatpush1.msra.mxu0 %v1333
    %1496 = vmatprep.subr.mxu0 0.0
    %1497 = vmatpush1.msra.mxu0 %v1334
    %1498 = vmatprep.subr.mxu0 0.0
    %1499 = vmatpush1.msra.mxu0 %v1335
    %1500 = vmatprep.subr.mxu0 0.0
    %1501 = vmatpush1.msra.mxu0 %v1336
    %1502 = vmatprep.subr.mxu0 0.0
    %1503 = vmatpush1.msra.mxu0 %v1337
    %1504 = vmatprep.subr.mxu0 0.0
    %1505 = vmatpush1.msra.mxu0 %v1338
    %1506 = vmatprep.mubr.f32.mxu0 %v1292
    %1507 = vmatmul.mubr.f32.gmra.mrb[0].mxu0 %v1291
    %v1508 = vpop.f32.mrb[0].mxu0
    %v1509 = vadd.f32 %v1440, %v1508
    %v1510 = vpop.f32.mrb[0].mxu0
    %1511 = vmatprep.mubr.f32.mxu0 %v1300
    %1512 = vmatmul.mubr.f32.gmra.mrb[0].mxu0 %v1299
    %v1513 = vpop.f32.mrb[0].mxu0
    %v1514 = vadd.f32 %v1440, %v1513
    %v1515 = vpop.f32.mrb[0].mxu0
    %1516 = vdwg.mxu0
    %1517 = vmatprep.subr.mxu0 0.0
    %1518 = vmatpush1.msra.mxu0 %v1339
    %1519 = vmatprep.subr.mxu0 0.0
    %1520 = vmatpush1.msra.mxu0 %v1340
    %1521 = vmatprep.subr.mxu0 0.0
    %1522 = vmatpush1.msra.mxu0 %v1341
    %1523 = vmatprep.subr.mxu0 0.0
    %1524 = vmatpush1.msra.mxu0 %v1342
    %1525 = vmatprep.subr.mxu0 0.0
    %1526 = vmatpush1.msra.mxu0 %v1343
    %1527 = vmatprep.subr.mxu0 0.0
    %1528 = vmatpush1.msra.mxu0 %v1344
    %1529 = vmatprep.subr.mxu0 0.0
    %1530 = vmatpush1.msra.mxu0 %v1345
    %1531 = vmatprep.subr.mxu0 0.0
    %1532 = vmatpush1.msra.mxu0 %v1346
    %1533 = vmatprep.subr.mxu0 0.0
    %1534 = vmatpush1.msra.mxu0 %v1347
    %1535 = vmatprep.subr.mxu0 0.0
    %1536 = vmatpush1.msra.mxu0 %v1348
    %1537 = vmatprep.subr.mxu0 0.0
    %1538 = vmatpush1.msra.mxu0 %v1349
    %1539 = vmatprep.subr.mxu0 0.0
    %1540 = vmatpush1.msra.mxu0 %v1350
    %1541 = vmatprep.subr.mxu0 0.0
    %1542 = vmatpush1.msra.mxu0 %v1351
    %1543 = vmatprep.subr.mxu0 0.0
    %1544 = vmatpush1.msra.mxu0 %v1352
    %1545 = vmatprep.subr.mxu0 0.0
    %1546 = vmatpush1.msra.mxu0 %v1353
    %1547 = vmatprep.subr.mxu0 0.0
    %1548 = vmatpush1.msra.mxu0 %v1354
    %1549 = vmatprep.subr.mxu0 0.0
    %1550 = vmatpush1.msra.mxu0 %v1355
    %1551 = vmatprep.subr.mxu0 0.0
    %1552 = vmatpush1.msra.mxu0 %v1356
    %1553 = vmatprep.subr.mxu0 0.0
    %1554 = vmatpush1.msra.mxu0 %v1357
    %1555 = vmatprep.subr.mxu0 0.0
    %1556 = vmatpush1.msra.mxu0 %v1358
    %1557 = vmatprep.subr.mxu0 0.0
    %1558 = vmatpush1.msra.mxu0 %v1359
    %1559 = vmatprep.subr.mxu0 0.0
    %1560 = vmatpush1.msra.mxu0 %v1360
    %1561 = vmatprep.subr.mxu0 0.0
    %1562 = vmatpush1.msra.mxu0 %v1361
    %1563 = vmatprep.subr.mxu0 0.0
    %1564 = vmatpush1.msra.mxu0 %v1362
    %1565 = vmatprep.subr.mxu0 0.0
    %1566 = vmatpush1.msra.mxu0 %v1363
    %1567 = vmatprep.subr.mxu0 0.0
    %1568 = vmatpush1.msra.mxu0 %v1364
    %1569 = vmatprep.subr.mxu0 0.0
    %1570 = vmatpush1.msra.mxu0 %v1365
    %1571 = vmatprep.subr.mxu0 0.0
    %1572 = vmatpush1.msra.mxu0 %v1366
    %1573 = vmatprep.subr.mxu0 0.0
    %1574 = vmatpush1.msra.mxu0 %v1367
    %1575 = vmatprep.subr.mxu0 0.0
    %1576 = vmatpush1.msra.mxu0 %v1368
    %1577 = vmatprep.subr.mxu0 0.0
    %1578 = vmatpush1.msra.mxu0 %v1369
    %1579 = vmatprep.subr.mxu0 0.0
    %1580 = vmatpush1.msra.mxu0 %v1370
    %1581 = vmatprep.mubr.f32.mxu0 %v1294
    %1582 = vmatmul.mubr.f32.gmra.mrb[0].mxu0 %v1293
    %v1583 = vpop.f32.mrb[0].mxu0
    %v1584 = vadd.f32 %v1509, %v1583
    %v1585 = vpop.f32.mrb[0].mxu0
    %1586 = vmatprep.mubr.f32.mxu0 %v1302
    %1587 = vmatmul.mubr.f32.gmra.mrb[0].mxu0 %v1301
    %v1588 = vpop.f32.mrb[0].mxu0
    %v1589 = vadd.f32 %v1514, %v1588
    %v1590 = vpop.f32.mrb[0].mxu0
    %1591 = vdwg.mxu0
    %1592 = vmatprep.subr.mxu0 0.0
    %1593 = vmatpush1.msra.mxu0 %v1371
    %1594 = vmatprep.subr.mxu0 0.0
    %1595 = vmatpush1.msra.mxu0 %v1372
    %1596 = vmatprep.subr.mxu0 0.0
    %1597 = vmatpush1.msra.mxu0 %v1373
    %1598 = vmatprep.subr.mxu0 0.0
    %1599 = vmatpush1.msra.mxu0 %v1374
    %1600 = vmatprep.subr.mxu0 0.0
    %1601 = vmatpush1.msra.mxu0 %v1375
    %1602 = vmatprep.subr.mxu0 0.0
    %1603 = vmatpush1.msra.mxu0 %v1376
    %1604 = vmatprep.subr.mxu0 0.0
    %1605 = vmatpush1.msra.mxu0 %v1377
    %1606 = vmatprep.subr.mxu0 0.0
    %1607 = vmatpush1.msra.mxu0 %v1378
    %1608 = vmatprep.subr.mxu0 0.0
    %1609 = vmatpush1.msra.mxu0 %v1379
    %1610 = vmatprep.subr.mxu0 0.0
    %1611 = vmatpush1.msra.mxu0 %v1380
    %1612 = vmatprep.subr.mxu0 0.0
    %1613 = vmatpush1.msra.mxu0 %v1381
    %1614 = vmatprep.subr.mxu0 0.0
    %1615 = vmatpush1.msra.mxu0 %v1382
    %1616 = vmatprep.subr.mxu0 0.0
    %1617 = vmatpush1.msra.mxu0 %v1383
    %1618 = vmatprep.subr.mxu0 0.0
    %1619 = vmatpush1.msra.mxu0 %v1384
    %1620 = vmatprep.subr.mxu0 0.0
    %1621 = vmatpush1.msra.mxu0 %v1385
    %1622 = vmatprep.subr.mxu0 0.0
    %1623 = vmatpush1.msra.mxu0 %v1386
    %1624 = vmatprep.subr.mxu0 0.0
    %1625 = vmatpush1.msra.mxu0 %v1387
    %1626 = vmatprep.subr.mxu0 0.0
    %1627 = vmatpush1.msra.mxu0 %v1388
    %1628 = vmatprep.subr.mxu0 0.0
    %1629 = vmatpush1.msra.mxu0 %v1389
    %1630 = vmatprep.subr.mxu0 0.0
    %1631 = vmatpush1.msra.mxu0 %v1390
    %1632 = vmatprep.subr.mxu0 0.0
    %1633 = vmatpush1.msra.mxu0 %v1391
    %1634 = vmatprep.subr.mxu0 0.0
    %1635 = vmatpush1.msra.mxu0 %v1392
    %1636 = vmatprep.subr.mxu0 0.0
    %1637 = vmatpush1.msra.mxu0 %v1393
    %1638 = vmatprep.subr.mxu0 0.0
    %1639 = vmatpush1.msra.mxu0 %v1394
    %1640 = vmatprep.subr.mxu0 0.0
    %1641 = vmatpush1.msra.mxu0 %v1395
    %1642 = vmatprep.subr.mxu0 0.0
    %1643 = vmatpush1.msra.mxu0 %v1396
    %1644 = vmatprep.subr.mxu0 0.0
    %1645 = vmatpush1.msra.mxu0 %v1397
    %1646 = vmatprep.subr.mxu0 0.0
    %1647 = vmatpush1.msra.mxu0 %v1398
    %1648 = vmatprep.subr.mxu0 0.0
    %1649 = vmatpush1.msra.mxu0 %v1399
    %1650 = vmatprep.subr.mxu0 0.0
    %1651 = vmatpush1.msra.mxu0 %v1400
    %1652 = vmatprep.subr.mxu0 0.0
    %1653 = vmatpush1.msra.mxu0 %v1401
    %1654 = vmatprep.subr.mxu0 0.0
    %1655 = vmatpush1.msra.mxu0 %v1402
    %1656 = vmatprep.mubr.f32.mxu0 %v1296
    %1657 = vmatmul.mubr.f32.gmra.mrb[0].mxu0 %v1295
    %v1658 = vpop.f32.mrb[0].mxu0
    %v1659 = vadd.f32 %v1584, %v1658
    %v1660 = vpop.f32.mrb[0].mxu0
    %1661 = vmatprep.mubr.f32.mxu0 %v1304
    %1662 = vmatmul.mubr.f32.gmra.mrb[0].mxu0 %v1303
    %v1663 = vpop.f32.mrb[0].mxu0
    %v1664 = vadd.f32 %v1589, %v1663
    %v1665 = vpop.f32.mrb[0].mxu0
    %1666 = vdwg.mxu0
    %1667 = vmatprep.subr.mxu0 0.0
    %1668 = vmatpush1.msra.mxu0 %v1403
    %1669 = vmatprep.subr.mxu0 0.0
    %1670 = vmatpush1.msra.mxu0 %v1404
    %1671 = vmatprep.subr.mxu0 0.0
    %1672 = vmatpush1.msra.mxu0 %v1405
    %1673 = vmatprep.subr.mxu0 0.0
    %1674 = vmatpush1.msra.mxu0 %v1406
    %1675 = vmatprep.subr.mxu0 0.0
    %1676 = vmatpush1.msra.mxu0 %v1407
    %1677 = vmatprep.subr.mxu0 0.0
    %1678 = vmatpush1.msra.mxu0 %v1408
    %1679 = vmatprep.subr.mxu0 0.0
    %1680 = vmatpush1.msra.mxu0 %v1409
    %1681 = vmatprep.subr.mxu0 0.0
    %1682 = vmatpush1.msra.mxu0 %v1410
    %1683 = vmatprep.subr.mxu0 0.0
    %1684 = vmatpush1.msra.mxu0 %v1411
    %1685 = vmatprep.subr.mxu0 0.0
    %1686 = vmatpush1.msra.mxu0 %v1412
    %1687 = vmatprep.subr.mxu0 0.0
    %1688 = vmatpush1.msra.mxu0 %v1413
    %1689 = vmatprep.subr.mxu0 0.0
    %1690 = vmatpush1.msra.mxu0 %v1414
    %1691 = vmatprep.subr.mxu0 0.0
    %1692 = vmatpush1.msra.mxu0 %v1415
    %1693 = vmatprep.subr.mxu0 0.0
    %1694 = vmatpush1.msra.mxu0 %v1416
    %1695 = vmatprep.subr.mxu0 0.0
    %1696 = vmatpush1.msra.mxu0 %v1417
    %1697 = vmatprep.subr.mxu0 0.0
    %1698 = vmatpush1.msra.mxu0 %v1418
    %1699 = vmatprep.subr.mxu0 0.0
    %1700 = vmatpush1.msra.mxu0 %v1419
    %1701 = vmatprep.subr.mxu0 0.0
    %1702 = vmatpush1.msra.mxu0 %v1420
    %1703 = vmatprep.subr.mxu0 0.0
    %1704 = vmatpush1.msra.mxu0 %v1421
    %1705 = vmatprep.subr.mxu0 0.0
    %1706 = vmatpush1.msra.mxu0 %v1422
    %1707 = vmatprep.subr.mxu0 0.0
    %1708 = vmatpush1.msra.mxu0 %v1423
    %1709 = vmatprep.subr.mxu0 0.0
    %1710 = vmatpush1.msra.mxu0 %v1424
    %1711 = vmatprep.subr.mxu0 0.0
    %1712 = vmatpush1.msra.mxu0 %v1425
    %1713 = vmatprep.subr.mxu0 0.0
    %1714 = vmatpush1.msra.mxu0 %v1426
    %1715 = vmatprep.subr.mxu0 0.0
    %1716 = vmatpush1.msra.mxu0 %v1427
    %1717 = vmatprep.subr.mxu0 0.0
    %1718 = vmatpush1.msra.mxu0 %v1428
    %1719 = vmatprep.subr.mxu0 0.0
    %1720 = vmatpush1.msra.mxu0 %v1429
    %1721 = vmatprep.subr.mxu0 0.0
    %1722 = vmatpush1.msra.mxu0 %v1430
    %1723 = vmatprep.subr.mxu0 0.0
    %1724 = vmatpush1.msra.mxu0 %v1431
    %1725 = vmatprep.subr.mxu0 0.0
    %1726 = vmatpush1.msra.mxu0 %v1432
    %1727 = vmatprep.subr.mxu0 0.0
    %1728 = vmatpush1.msra.mxu0 %v1433
    %1729 = vmatprep.subr.mxu0 0.0
    %1730 = vmatpush1.msra.mxu0 %v1434
    %1731 = vmatprep.mubr.f32.mxu0 %v1298
    %1732 = vmatmul.mubr.f32.gmra.mrb[0].mxu0 %v1297
    %v1733 = vpop.f32.mrb[0].mxu0
    %v1734 = vadd.f32 %v1659, %v1733
    %v1735 = vpop.f32.mrb[0].mxu0
    %1736 = vmatprep.mubr.f32.mxu0 %v1306
    %1737 = vmatmul.mubr.f32.gmra.mrb[0].mxu0 %v1305
    %v1738 = vpop.f32.mrb[0].mxu0
    %v1739 = vadd.f32 %v1664, %v1738
    %v1740 = vpop.f32.mrb[0].mxu0
    %1741 = vdwg.mxu0
    %v1742 = vtanh.pop %v1734
    %v1743 = vtanh.pop %v1739
    %1744 = vst.msk [vmem:[%s17] sm:$0xff] %vm253, %v1742
    %1745 = vst.msk [vmem:[%s17 + $0x8] sm:$0xff] %vm253, %v1743
    // Predicated region
    $region70: #{local_sage_plus_forward.2} parent=1 // pred_check
      _
    $region71: #{local_sage_plus_forward.2} parent=1 // pred_check_branch
      %1747 = sbr.rel (0) target = $region73
    $region72: #{local_sage_plus_forward.2} parent=1 // pred_region
      _
    $region73: #{local_sage_plus_forward.2} parent=1 // pred_fallthru
      _
    // Predicated region
    $region74: #{local_sage_plus_forward.2} parent=1 // pred_check
      _
    $region75: #{local_sage_plus_forward.2} parent=1 // pred_check_branch
      %1749 = sbr.rel (0) target = $region77
    $region76: #{local_sage_plus_forward.2} parent=1 // pred_region
      _
    $region77: #{local_sage_plus_forward.2} parent=1 // pred_fallthru
      _
    // Predicated region
    $region78: #{local_sage_plus_forward.2} parent=1 // pred_check
      _
    $region79: #{local_sage_plus_forward.2} parent=1 // pred_check_branch
      %1751 = sbr.rel (0) target = $region81
    $region80: #{local_sage_plus_forward.2} parent=1 // pred_region
      _
    $region81: #{local_sage_plus_forward.2} parent=1 // pred_fallthru
      _
    // Predicated region
    $region82: #{local_sage_plus_forward.2} parent=1 // pred_check
      _
    $region83: #{local_sage_plus_forward.2} parent=1 // pred_check_branch
      %1753 = sbr.rel (0) target = $region85
    $region84: #{local_sage_plus_forward.2} parent=1 // pred_region
      _
    $region85: #{local_sage_plus_forward.2} parent=1 // pred_fallthru
      _
    %1754 = vsyncpa [#allocation4], 1

</llo_original>
